<compile_context>
chip_gen: v7x
topology: tpu7x:2x2x1
jax: 0.10.0
libtpu: 0.0.40
codegen_flags: <defaults>
</compile_context>

<pallas_src>
import functools

import jax
import jax.numpy as jnp
from jax.experimental import pallas as pl
from jax.experimental.pallas import tpu as pltpu

OPT = dict(nc=4, nf=32, nb=2, ksize=3, spatial=False, mix=True,
           zero_init=False, head_k=1, body_k=1)
SCALE = 1          # mix=True requires scale == 1 in the reference forward
EPS = 1e-5         # torch BatchNorm2d default eps


# ----------------------------- fused Pallas kernel ---------------------------
def _fused_deg_kernel(x_ref, zk_ref, xunf_ref,
                      whx_ref, whz_ref, g0_ref, be0_ref,
                      w1s_ref, grs_ref, bes_ref,
                      w2s_ref, b2s_ref, wt_ref, bt_ref,
                      kern_ref, y_ref, *, B, C, HW, nc, nb, k2):
    """Per-pixel deg_kernel MLP + softmax + k^2-tap degradation apply.

    Layout: channels on sublanes, pixels (b*HW + h*W + w) lane-dense on lanes.
    Weights arrive pre-cast to bf16; matmuls accumulate in f32 on the MXU.
    """
    N = B * HW
    inv_n = 1.0 / N

    def mm(w_bf16, a):
        return jnp.dot(w_bf16, a.astype(jnp.bfloat16),
                       preferred_element_type=jnp.float32)

    def bn_relu(t, gamma, beta):
        # train-mode BatchNorm, one-pass stats: var = E[x^2] - mean^2
        s1 = jnp.sum(t, axis=1, keepdims=True)
        s2 = jnp.sum(t * t, axis=1, keepdims=True)
        mu = s1 * inv_n
        var = s2 * inv_n - mu * mu
        scale = gamma * jax.lax.rsqrt(var + EPS)
        return jnp.maximum((t - mu) * scale + beta, 0.0)

    x = x_ref[...]                                      # (C, N)  f32
    zk = zk_ref[...]                                    # (nc, B) f32

    # head conv:  wh @ [x ; zk.repeat(1,1,H,W)]  ==  whx @ x + whz @ repeat(zk)
    # The per-batch zk repeat is built in VMEM via lane broadcast + lane concat
    # (never materialized in HBM).  Head conv bias omitted: exactly cancelled
    # by the train-mode BN mean subtraction that follows.
    zk_full = jnp.concatenate(
        [jnp.broadcast_to(zk[:, b:b + 1], (nc, HW)) for b in range(B)], axis=1)
    h = mm(whx_ref[...], x) + mm(whz_ref[...], zk_full)         # (nf, N)
    h = bn_relu(h, g0_ref[...], be0_ref[...])

    # ResBlocks: 1x1 conv -> BN -> ReLU -> 1x1 conv, residual add
    for i in range(nb):
        t = mm(w1s_ref[i], h)                # conv1 bias cancelled by BN
        t = bn_relu(t, grs_ref[i], bes_ref[i])
        t = mm(w2s_ref[i], t) + b2s_ref[i]
        h = h + t

    # tail 1x1 conv -> softmax over the k^2 taps (sublane axis), exact recip.
    logits = mm(wt_ref[...], h) + bt_ref[...]           # (k2, N)
    m = jnp.max(logits, axis=0, keepdims=True)
    e = jnp.exp(logits - m)
    s = jnp.sum(e, axis=0, keepdims=True)
    kern = e * pl.reciprocal(s)                         # (k2, N), sums to 1

    # degradation apply:  y[c, n] = sum_k xunf[c, k, n] * kern[k, n]
    # k-sum is a sublane reduce (XLU slot, otherwise idle here).
    rows = [jnp.sum(xunf_ref[c] * kern, axis=0, keepdims=True) for c in range(C)]
    acc = jnp.concatenate(rows, axis=0)                 # (C, N)

    # batch-major, lane-dense slab stores (HW multiple of 128) -> no
    # wrapper-side output transposes.
    for b in range(B):
        kern_ref[b] = kern[:, b * HW:(b + 1) * HW]
        y_ref[b] = acc[:, b * HW:(b + 1) * HW]


# ---------------------------------- wrapper -----------------------------------
def kernel_model_forward(x, zk, params):
    B, C, H, W = x.shape
    ksize, nc, nf, nb = OPT['ksize'], OPT['nc'], OPT['nf'], OPT['nb']
    k2 = ksize * ksize
    HW = H * W
    N = B * HW                                          # lane-dense pixel axis

    # channels-on-sublanes MLP input (C, N); zk stays (nc, B), repeated in-kernel
    x_cn = jnp.transpose(x, (1, 0, 2, 3)).reshape(C, N)
    zk_cb = zk.reshape(B, nc).T                         # (nc, B)

    # im2col: reflection-padded shifted views, repacked as (C, k2, N)
    # (reference = ReflectionPad2d(k//2) followed by F.unfold(..., padding=0))
    pad = ksize // 2
    xpad = jnp.pad(x, ((0, 0), (0, 0), (pad, pad), (pad, pad)), mode='reflect')
    patches = [xpad[:, :, di:di + H, dj:dj + W]
               for di in range(ksize) for dj in range(ksize)]
    xunf = jnp.stack(patches, axis=2)                   # (B, C, k2, H, W)
    xunf = jnp.transpose(xunf, (1, 2, 0, 3, 4)).reshape(C, k2, N)

    # pre-cast matmul weights to bf16 (f32 MXU accumulation inside the kernel)
    bf16 = jnp.bfloat16
    whx = params['wh'][:, :C].astype(bf16)              # (nf, C)
    whz = params['wh'][:, C:].astype(bf16)              # (nf, nc)
    w1s = params['w1s'].astype(bf16)
    w2s = params['w2s'].astype(bf16)
    wt = params['wt'].astype(bf16)

    vmem = pl.BlockSpec(memory_space=pltpu.MemorySpace.VMEM)
    fused = pl.pallas_call(
        functools.partial(_fused_deg_kernel,
                          B=B, C=C, HW=HW, nc=nc, nb=nb, k2=k2),
        out_shape=(jax.ShapeDtypeStruct((B, k2, HW), jnp.float32),  # kernel
                   jax.ShapeDtypeStruct((B, C, HW), jnp.float32)),  # degraded
        in_specs=[vmem] * 14,
        out_specs=(vmem, vmem),
    )
    kern_slab, y_slab = fused(
        x_cn, zk_cb, xunf,
        whx, whz, params['g0'], params['be0'],
        w1s, params['grs'], params['bes'],
        w2s, params['b2s'], wt, params['bt'])

    # free reshapes only (no transposes): slabs are already batch-major
    y = y_slab.reshape(B, C, H, W)
    kernel_out = kern_slab.reshape(B, ksize, ksize, H, W)
    return y, kernel_out


# ----------------------- pure-JAX reference (for checking) --------------------
def _reference_forward(x, zk, params):
    B, C, H, W = x.shape
    ksize, nc, nb = OPT['ksize'], OPT['nc'], OPT['nb']
    k2 = ksize * ksize

    zk_r = jnp.broadcast_to(zk, (B, nc, H, W))
    inp = jnp.concatenate([x, zk_r], axis=1).reshape(B, C + nc, H * W)

    def conv1x1(w, t, b=None):
        y = jnp.einsum('oi,bip->bop', w.astype(jnp.bfloat16),
                       t.astype(jnp.bfloat16),
                       preferred_element_type=jnp.float32)
        return y if b is None else y + b.reshape(1, -1, 1)

    def bn(t, gamma, beta):
        mu = jnp.mean(t, axis=(0, 2), keepdims=True)
        var = jnp.mean((t - mu) ** 2, axis=(0, 2), keepdims=True)
        return ((t - mu) / jnp.sqrt(var + EPS) * gamma.reshape(1, -1, 1)
                + beta.reshape(1, -1, 1))

    h = jax.nn.relu(bn(conv1x1(params['wh'], inp), params['g0'], params['be0']))
    for i in range(nb):
        t = jax.nn.relu(bn(conv1x1(params['w1s'][i], h),
                           params['grs'][i], params['bes'][i]))
        t = conv1x1(params['w2s'][i], t, params['b2s'][i])
        h = h + t
    logits = conv1x1(params['wt'], h, params['bt'])          # (B, k2, HW)
    kern = jax.nn.softmax(logits, axis=1)

    pad = ksize // 2
    xpad = jnp.pad(x, ((0, 0), (0, 0), (pad, pad), (pad, pad)), mode='reflect')
    patches = jnp.stack([xpad[:, :, di:di + H, dj:dj + W]
                         for di in range(ksize) for dj in range(ksize)], axis=2)
    y = jnp.sum(patches * kern.reshape(B, 1, k2, H, W), axis=2)
    return y, kern.reshape(B, ksize, ksize, H, W)


if __name__ == "__main__":
    key = jax.random.PRNGKey(0)
    ks = jax.random.split(key, 12)

    B, C, H, W = 2, 3, 16, 16
    nc, nf, nb = OPT['nc'], OPT['nf'], OPT['nb']
    cin = 3 + nc
    k2 = OPT['ksize'] ** 2

    x = jax.random.normal(ks[0], (B, C, H, W), jnp.float32)
    # torch.randn(B, nc, 1, 1) noise input, generated host-side (deterministic)
    zk = jax.random.normal(ks[1], (B, nc, 1, 1), jnp.float32)

    # Deterministic synthetic parameters (torch 1x1-conv layout (out_ch, in_ch)).
    # Head / ResBlock-conv1 biases are omitted: they feed train-mode BN and are
    # exactly cancelled by the mean subtraction.
    params = dict(
        wh=0.1 * jax.random.normal(ks[2], (nf, cin), jnp.float32),
        g0=1.0 + 0.1 * jax.random.normal(ks[3], (nf, 1), jnp.float32),
        be0=0.1 * jax.random.normal(ks[4], (nf, 1), jnp.float32),
        w1s=0.1 * jax.random.normal(ks[5], (nb, nf, nf), jnp.float32),
        grs=1.0 + 0.1 * jax.random.normal(ks[6], (nb, nf, 1), jnp.float32),
        bes=0.1 * jax.random.normal(ks[7], (nb, nf, 1), jnp.float32),
        w2s=0.1 * jax.random.normal(ks[8], (nb, nf, nf), jnp.float32),
        b2s=0.1 * jax.random.normal(ks[9], (nb, nf, 1), jnp.float32),
        wt=0.1 * jax.random.normal(ks[10], (k2, nf), jnp.float32),
        bt=0.1 * jax.random.normal(ks[11], (k2, 1), jnp.float32),
    )

    fwd = jax.jit(kernel_model_forward)
    y, kern = fwd(x, zk, params)
    jax.block_until_ready((y, kern))

    assert y.shape == (B, C, H // SCALE, W // SCALE), y.shape
    assert kern.shape == (B, OPT['ksize'], OPT['ksize'], H, W), kern.shape

    # softmax sanity: exact reciprocal -> per-pixel kernel weights sum to 1
    ksum = jnp.sum(kern, axis=(1, 2))
    assert bool(jnp.all(jnp.abs(ksum - 1.0) < 1e-3)), \
        float(jnp.max(jnp.abs(ksum - 1.0)))

    # numerical check against a pure-JAX/XLA reference of the same forward
    y_ref, kern_ref = jax.jit(_reference_forward)(x, zk, params)
    jax.block_until_ready((y_ref, kern_ref))
    assert bool(jnp.max(jnp.abs(y - y_ref)) < 5e-2), \
        float(jnp.max(jnp.abs(y - y_ref)))
    assert bool(jnp.max(jnp.abs(kern - kern_ref)) < 2e-2), \
        float(jnp.max(jnp.abs(kern - kern_ref)))

    print("KERNEL_OK")
</pallas_src>

<mosaic_0001>
module attributes {stable_mosaic.version = 11 : i64} {
  func.func @_fused_deg_kernel(%arg0: memref<3x512xf32, #tpu.memory_space<vmem>>, %arg1: memref<4x2xf32, #tpu.memory_space<vmem>>, %arg2: memref<3x9x512xf32, #tpu.memory_space<vmem>>, %arg3: memref<32x3xbf16, #tpu.memory_space<vmem>>, %arg4: memref<32x4xbf16, #tpu.memory_space<vmem>>, %arg5: memref<32x1xf32, #tpu.memory_space<vmem>>, %arg6: memref<32x1xf32, #tpu.memory_space<vmem>>, %arg7: memref<2x32x32xbf16, #tpu.memory_space<vmem>>, %arg8: memref<2x32x1xf32, #tpu.memory_space<vmem>>, %arg9: memref<2x32x1xf32, #tpu.memory_space<vmem>>, %arg10: memref<2x32x32xbf16, #tpu.memory_space<vmem>>, %arg11: memref<2x32x1xf32, #tpu.memory_space<vmem>>, %arg12: memref<9x32xbf16, #tpu.memory_space<vmem>>, %arg13: memref<9x1xf32, #tpu.memory_space<vmem>>, %arg14: memref<2x9x256xf32, #tpu.memory_space<vmem>>, %arg15: memref<2x3x256xf32, #tpu.memory_space<vmem>>) attributes {dimension_semantics = [], scalar_prefetch = 0 : i64, scratch_operands = 0 : i64, tpu.core_type = #tpu.core_type<tc>} {
    %c0 = arith.constant 0 : index
    %c0_0 = arith.constant 0 : index
    %0 = vector.load %arg0[%c0, %c0_0] : memref<3x512xf32, #tpu.memory_space<vmem>>, vector<3x512xf32>
    %c0_1 = arith.constant 0 : index
    %c0_2 = arith.constant 0 : index
    %1 = vector.load %arg1[%c0_1, %c0_2] : memref<4x2xf32, #tpu.memory_space<vmem>>, vector<4x2xf32>
    %2 = vector.extract_strided_slice %1 {offsets = [0, 0], sizes = [4, 1], strides = [1, 1]} : vector<4x2xf32> to vector<4x1xf32>
    %3 = vector.shape_cast %2 : vector<4x1xf32> to vector<4x1xf32>
    %4 = vector.broadcast %3 : vector<4x1xf32> to vector<4x256xf32>
    %5 = vector.extract_strided_slice %1 {offsets = [0, 1], sizes = [4, 1], strides = [1, 1]} : vector<4x2xf32> to vector<4x1xf32>
    %6 = vector.shape_cast %5 : vector<4x1xf32> to vector<4x1xf32>
    %7 = vector.broadcast %6 : vector<4x1xf32> to vector<4x256xf32>
    %8 = tpu.concatenate %4, %7 in 1 : vector<4x256xf32>, vector<4x256xf32> -> vector<4x512xf32>
    %c0_3 = arith.constant 0 : index
    %c0_4 = arith.constant 0 : index
    %9 = vector.load %arg3[%c0_3, %c0_4] : memref<32x3xbf16, #tpu.memory_space<vmem>>, vector<32x3xbf16>
    %10 = arith.truncf %0 : vector<3x512xf32> to vector<3x512xbf16>
    %cst = arith.constant dense<0.000000e+00> : vector<32x512xf32>
    %11 = tpu.matmul %9, %10, %cst {dimension_numbers = #tpu.dot_dimension_numbers<[1], [0], [0], [1], [0, 0, 1, 1], [], []>} : vector<32x3xbf16>, vector<3x512xbf16>, vector<32x512xf32> -> vector<32x512xf32>
    %c0_5 = arith.constant 0 : index
    %c0_6 = arith.constant 0 : index
    %12 = vector.load %arg4[%c0_5, %c0_6] : memref<32x4xbf16, #tpu.memory_space<vmem>>, vector<32x4xbf16>
    %13 = arith.truncf %8 : vector<4x512xf32> to vector<4x512xbf16>
    %cst_7 = arith.constant dense<0.000000e+00> : vector<32x512xf32>
    %14 = tpu.matmul %12, %13, %cst_7 {dimension_numbers = #tpu.dot_dimension_numbers<[1], [0], [0], [1], [0, 0, 1, 1], [], []>} : vector<32x4xbf16>, vector<4x512xbf16>, vector<32x512xf32> -> vector<32x512xf32>
    %15 = arith.addf %11, %14 : vector<32x512xf32>
    %c0_8 = arith.constant 0 : index
    %c0_9 = arith.constant 0 : index
    %16 = vector.load %arg5[%c0_8, %c0_9] : memref<32x1xf32, #tpu.memory_space<vmem>>, vector<32x1xf32>
    %c0_10 = arith.constant 0 : index
    %c0_11 = arith.constant 0 : index
    %17 = vector.load %arg6[%c0_10, %c0_11] : memref<32x1xf32, #tpu.memory_space<vmem>>, vector<32x1xf32>
    %cst_12 = arith.constant dense<0.000000e+00> : vector<32xf32>
    %18 = vector.multi_reduction <add>, %15, %cst_12 [1] : vector<32x512xf32> to vector<32xf32>
    %19 = vector.shape_cast %18 : vector<32xf32> to vector<32x1xf32>
    %20 = arith.mulf %15, %15 : vector<32x512xf32>
    %cst_13 = arith.constant dense<0.000000e+00> : vector<32xf32>
    %21 = vector.multi_reduction <add>, %20, %cst_13 [1] : vector<32x512xf32> to vector<32xf32>
    %22 = vector.shape_cast %21 : vector<32xf32> to vector<32x1xf32>
    %cst_14 = arith.constant 0.001953125 : f32
    %23 = vector.broadcast %cst_14 : f32 to vector<32x1xf32>
    %24 = arith.mulf %19, %23 : vector<32x1xf32>
    %cst_15 = arith.constant 0.001953125 : f32
    %25 = vector.broadcast %cst_15 : f32 to vector<32x1xf32>
    %26 = arith.mulf %22, %25 : vector<32x1xf32>
    %27 = arith.mulf %24, %24 : vector<32x1xf32>
    %28 = arith.subf %26, %27 : vector<32x1xf32>
    %cst_16 = arith.constant 9.99999974E-6 : f32
    %29 = vector.broadcast %cst_16 : f32 to vector<32x1xf32>
    %30 = arith.addf %28, %29 : vector<32x1xf32>
    %31 = math.rsqrt %30 : vector<32x1xf32>
    %32 = arith.mulf %16, %31 : vector<32x1xf32>
    %33 = vector.broadcast %24 : vector<32x1xf32> to vector<32x512xf32>
    %34 = arith.subf %15, %33 : vector<32x512xf32>
    %35 = vector.broadcast %32 : vector<32x1xf32> to vector<32x512xf32>
    %36 = arith.mulf %34, %35 : vector<32x512xf32>
    %37 = vector.broadcast %17 : vector<32x1xf32> to vector<32x512xf32>
    %38 = arith.addf %36, %37 : vector<32x512xf32>
    %cst_17 = arith.constant 0.000000e+00 : f32
    %39 = vector.broadcast %cst_17 : f32 to vector<32x512xf32>
    %40 = arith.maximumf %38, %39 : vector<32x512xf32>
    %c0_18 = arith.constant 0 : index
    %c0_19 = arith.constant 0 : index
    %c0_20 = arith.constant 0 : index
    %41 = vector.load %arg7[%c0_18, %c0_19, %c0_20] : memref<2x32x32xbf16, #tpu.memory_space<vmem>>, vector<1x32x32xbf16>
    %42 = vector.shape_cast %41 : vector<1x32x32xbf16> to vector<32x32xbf16>
    %43 = arith.truncf %40 : vector<32x512xf32> to vector<32x512xbf16>
    %cst_21 = arith.constant dense<0.000000e+00> : vector<32x512xf32>
    %44 = tpu.matmul %42, %43, %cst_21 {dimension_numbers = #tpu.dot_dimension_numbers<[1], [0], [0], [1], [0, 0, 1, 1], [], []>} : vector<32x32xbf16>, vector<32x512xbf16>, vector<32x512xf32> -> vector<32x512xf32>
    %c0_22 = arith.constant 0 : index
    %c0_23 = arith.constant 0 : index
    %c0_24 = arith.constant 0 : index
    %45 = vector.load %arg8[%c0_22, %c0_23, %c0_24] : memref<2x32x1xf32, #tpu.memory_space<vmem>>, vector<1x32x1xf32>
    %46 = vector.shape_cast %45 : vector<1x32x1xf32> to vector<32x1xf32>
    %c0_25 = arith.constant 0 : index
    %c0_26 = arith.constant 0 : index
    %c0_27 = arith.constant 0 : index
    %47 = vector.load %arg9[%c0_25, %c0_26, %c0_27] : memref<2x32x1xf32, #tpu.memory_space<vmem>>, vector<1x32x1xf32>
    %48 = vector.shape_cast %47 : vector<1x32x1xf32> to vector<32x1xf32>
    %cst_28 = arith.constant dense<0.000000e+00> : vector<32xf32>
    %49 = vector.multi_reduction <add>, %44, %cst_28 [1] : vector<32x512xf32> to vector<32xf32>
    %50 = vector.shape_cast %49 : vector<32xf32> to vector<32x1xf32>
    %51 = arith.mulf %44, %44 : vector<32x512xf32>
    %cst_29 = arith.constant dense<0.000000e+00> : vector<32xf32>
    %52 = vector.multi_reduction <add>, %51, %cst_29 [1] : vector<32x512xf32> to vector<32xf32>
    %53 = vector.shape_cast %52 : vector<32xf32> to vector<32x1xf32>
    %cst_30 = arith.constant 0.001953125 : f32
    %54 = vector.broadcast %cst_30 : f32 to vector<32x1xf32>
    %55 = arith.mulf %50, %54 : vector<32x1xf32>
    %cst_31 = arith.constant 0.001953125 : f32
    %56 = vector.broadcast %cst_31 : f32 to vector<32x1xf32>
    %57 = arith.mulf %53, %56 : vector<32x1xf32>
    %58 = arith.mulf %55, %55 : vector<32x1xf32>
    %59 = arith.subf %57, %58 : vector<32x1xf32>
    %cst_32 = arith.constant 9.99999974E-6 : f32
    %60 = vector.broadcast %cst_32 : f32 to vector<32x1xf32>
    %61 = arith.addf %59, %60 : vector<32x1xf32>
    %62 = math.rsqrt %61 : vector<32x1xf32>
    %63 = arith.mulf %46, %62 : vector<32x1xf32>
    %64 = vector.broadcast %55 : vector<32x1xf32> to vector<32x512xf32>
    %65 = arith.subf %44, %64 : vector<32x512xf32>
    %66 = vector.broadcast %63 : vector<32x1xf32> to vector<32x512xf32>
    %67 = arith.mulf %65, %66 : vector<32x512xf32>
    %68 = vector.broadcast %48 : vector<32x1xf32> to vector<32x512xf32>
    %69 = arith.addf %67, %68 : vector<32x512xf32>
    %cst_33 = arith.constant 0.000000e+00 : f32
    %70 = vector.broadcast %cst_33 : f32 to vector<32x512xf32>
    %71 = arith.maximumf %69, %70 : vector<32x512xf32>
    %c0_34 = arith.constant 0 : index
    %c0_35 = arith.constant 0 : index
    %c0_36 = arith.constant 0 : index
    %72 = vector.load %arg10[%c0_34, %c0_35, %c0_36] : memref<2x32x32xbf16, #tpu.memory_space<vmem>>, vector<1x32x32xbf16>
    %73 = vector.shape_cast %72 : vector<1x32x32xbf16> to vector<32x32xbf16>
    %74 = arith.truncf %71 : vector<32x512xf32> to vector<32x512xbf16>
    %cst_37 = arith.constant dense<0.000000e+00> : vector<32x512xf32>
    %75 = tpu.matmul %73, %74, %cst_37 {dimension_numbers = #tpu.dot_dimension_numbers<[1], [0], [0], [1], [0, 0, 1, 1], [], []>} : vector<32x32xbf16>, vector<32x512xbf16>, vector<32x512xf32> -> vector<32x512xf32>
    %c0_38 = arith.constant 0 : index
    %c0_39 = arith.constant 0 : index
    %c0_40 = arith.constant 0 : index
    %76 = vector.load %arg11[%c0_38, %c0_39, %c0_40] : memref<2x32x1xf32, #tpu.memory_space<vmem>>, vector<1x32x1xf32>
    %77 = vector.shape_cast %76 : vector<1x32x1xf32> to vector<32x1xf32>
    %78 = vector.broadcast %77 : vector<32x1xf32> to vector<32x512xf32>
    %79 = arith.addf %75, %78 : vector<32x512xf32>
    %80 = arith.addf %40, %79 : vector<32x512xf32>
    %c1 = arith.constant 1 : index
    %c0_41 = arith.constant 0 : index
    %c0_42 = arith.constant 0 : index
    %81 = vector.load %arg7[%c1, %c0_41, %c0_42] : memref<2x32x32xbf16, #tpu.memory_space<vmem>>, vector<1x32x32xbf16>
    %82 = vector.shape_cast %81 : vector<1x32x32xbf16> to vector<32x32xbf16>
    %83 = arith.truncf %80 : vector<32x512xf32> to vector<32x512xbf16>
    %cst_43 = arith.constant dense<0.000000e+00> : vector<32x512xf32>
    %84 = tpu.matmul %82, %83, %cst_43 {dimension_numbers = #tpu.dot_dimension_numbers<[1], [0], [0], [1], [0, 0, 1, 1], [], []>} : vector<32x32xbf16>, vector<32x512xbf16>, vector<32x512xf32> -> vector<32x512xf32>
    %c1_44 = arith.constant 1 : index
    %c0_45 = arith.constant 0 : index
    %c0_46 = arith.constant 0 : index
    %85 = vector.load %arg8[%c1_44, %c0_45, %c0_46] : memref<2x32x1xf32, #tpu.memory_space<vmem>>, vector<1x32x1xf32>
    %86 = vector.shape_cast %85 : vector<1x32x1xf32> to vector<32x1xf32>
    %c1_47 = arith.constant 1 : index
    %c0_48 = arith.constant 0 : index
    %c0_49 = arith.constant 0 : index
    %87 = vector.load %arg9[%c1_47, %c0_48, %c0_49] : memref<2x32x1xf32, #tpu.memory_space<vmem>>, vector<1x32x1xf32>
    %88 = vector.shape_cast %87 : vector<1x32x1xf32> to vector<32x1xf32>
    %cst_50 = arith.constant dense<0.000000e+00> : vector<32xf32>
    %89 = vector.multi_reduction <add>, %84, %cst_50 [1] : vector<32x512xf32> to vector<32xf32>
    %90 = vector.shape_cast %89 : vector<32xf32> to vector<32x1xf32>
    %91 = arith.mulf %84, %84 : vector<32x512xf32>
    %cst_51 = arith.constant dense<0.000000e+00> : vector<32xf32>
    %92 = vector.multi_reduction <add>, %91, %cst_51 [1] : vector<32x512xf32> to vector<32xf32>
    %93 = vector.shape_cast %92 : vector<32xf32> to vector<32x1xf32>
    %cst_52 = arith.constant 0.001953125 : f32
    %94 = vector.broadcast %cst_52 : f32 to vector<32x1xf32>
    %95 = arith.mulf %90, %94 : vector<32x1xf32>
    %cst_53 = arith.constant 0.001953125 : f32
    %96 = vector.broadcast %cst_53 : f32 to vector<32x1xf32>
    %97 = arith.mulf %93, %96 : vector<32x1xf32>
    %98 = arith.mulf %95, %95 : vector<32x1xf32>
    %99 = arith.subf %97, %98 : vector<32x1xf32>
    %cst_54 = arith.constant 9.99999974E-6 : f32
    %100 = vector.broadcast %cst_54 : f32 to vector<32x1xf32>
    %101 = arith.addf %99, %100 : vector<32x1xf32>
    %102 = math.rsqrt %101 : vector<32x1xf32>
    %103 = arith.mulf %86, %102 : vector<32x1xf32>
    %104 = vector.broadcast %95 : vector<32x1xf32> to vector<32x512xf32>
    %105 = arith.subf %84, %104 : vector<32x512xf32>
    %106 = vector.broadcast %103 : vector<32x1xf32> to vector<32x512xf32>
    %107 = arith.mulf %105, %106 : vector<32x512xf32>
    %108 = vector.broadcast %88 : vector<32x1xf32> to vector<32x512xf32>
    %109 = arith.addf %107, %108 : vector<32x512xf32>
    %cst_55 = arith.constant 0.000000e+00 : f32
    %110 = vector.broadcast %cst_55 : f32 to vector<32x512xf32>
    %111 = arith.maximumf %109, %110 : vector<32x512xf32>
    %c1_56 = arith.constant 1 : index
    %c0_57 = arith.constant 0 : index
    %c0_58 = arith.constant 0 : index
    %112 = vector.load %arg10[%c1_56, %c0_57, %c0_58] : memref<2x32x32xbf16, #tpu.memory_space<vmem>>, vector<1x32x32xbf16>
    %113 = vector.shape_cast %112 : vector<1x32x32xbf16> to vector<32x32xbf16>
    %114 = arith.truncf %111 : vector<32x512xf32> to vector<32x512xbf16>
    %cst_59 = arith.constant dense<0.000000e+00> : vector<32x512xf32>
    %115 = tpu.matmul %113, %114, %cst_59 {dimension_numbers = #tpu.dot_dimension_numbers<[1], [0], [0], [1], [0, 0, 1, 1], [], []>} : vector<32x32xbf16>, vector<32x512xbf16>, vector<32x512xf32> -> vector<32x512xf32>
    %c1_60 = arith.constant 1 : index
    %c0_61 = arith.constant 0 : index
    %c0_62 = arith.constant 0 : index
    %116 = vector.load %arg11[%c1_60, %c0_61, %c0_62] : memref<2x32x1xf32, #tpu.memory_space<vmem>>, vector<1x32x1xf32>
    %117 = vector.shape_cast %116 : vector<1x32x1xf32> to vector<32x1xf32>
    %118 = vector.broadcast %117 : vector<32x1xf32> to vector<32x512xf32>
    %119 = arith.addf %115, %118 : vector<32x512xf32>
    %120 = arith.addf %80, %119 : vector<32x512xf32>
    %c0_63 = arith.constant 0 : index
    %c0_64 = arith.constant 0 : index
    %121 = vector.load %arg12[%c0_63, %c0_64] : memref<9x32xbf16, #tpu.memory_space<vmem>>, vector<9x32xbf16>
    %122 = arith.truncf %120 : vector<32x512xf32> to vector<32x512xbf16>
    %cst_65 = arith.constant dense<0.000000e+00> : vector<9x512xf32>
    %123 = tpu.matmul %121, %122, %cst_65 {dimension_numbers = #tpu.dot_dimension_numbers<[1], [0], [0], [1], [0, 0, 1, 1], [], []>} : vector<9x32xbf16>, vector<32x512xbf16>, vector<9x512xf32> -> vector<9x512xf32>
    %c0_66 = arith.constant 0 : index
    %c0_67 = arith.constant 0 : index
    %124 = vector.load %arg13[%c0_66, %c0_67] : memref<9x1xf32, #tpu.memory_space<vmem>>, vector<9x1xf32>
    %125 = vector.broadcast %124 : vector<9x1xf32> to vector<9x512xf32>
    %126 = arith.addf %123, %125 : vector<9x512xf32>
    %cst_68 = arith.constant dense<0xFF800000> : vector<512xf32>
    %127 = vector.multi_reduction <maximumf>, %126, %cst_68 [0] : vector<9x512xf32> to vector<512xf32>
    %128 = vector.shape_cast %127 : vector<512xf32> to vector<1x512xf32>
    %129 = vector.broadcast %128 : vector<1x512xf32> to vector<9x512xf32>
    %130 = arith.subf %126, %129 : vector<9x512xf32>
    %131 = math.exp %130 : vector<9x512xf32>
    %cst_69 = arith.constant dense<0.000000e+00> : vector<512xf32>
    %132 = vector.multi_reduction <add>, %131, %cst_69 [0] : vector<9x512xf32> to vector<512xf32>
    %133 = vector.shape_cast %132 : vector<512xf32> to vector<1x512xf32>
    %134 = tpu.reciprocal %133 : vector<1x512xf32> -> vector<1x512xf32>
    %135 = vector.broadcast %134 : vector<1x512xf32> to vector<9x512xf32>
    %136 = arith.mulf %131, %135 : vector<9x512xf32>
    %c0_70 = arith.constant 0 : index
    %c0_71 = arith.constant 0 : index
    %c0_72 = arith.constant 0 : index
    %137 = vector.load %arg2[%c0_70, %c0_71, %c0_72] : memref<3x9x512xf32, #tpu.memory_space<vmem>>, vector<1x9x512xf32>
    %138 = vector.shape_cast %137 : vector<1x9x512xf32> to vector<9x512xf32>
    %139 = arith.mulf %138, %136 : vector<9x512xf32>
    %cst_73 = arith.constant dense<0.000000e+00> : vector<512xf32>
    %140 = vector.multi_reduction <add>, %139, %cst_73 [0] : vector<9x512xf32> to vector<512xf32>
    %141 = vector.shape_cast %140 : vector<512xf32> to vector<1x512xf32>
    %c1_74 = arith.constant 1 : index
    %c0_75 = arith.constant 0 : index
    %c0_76 = arith.constant 0 : index
    %142 = vector.load %arg2[%c1_74, %c0_75, %c0_76] : memref<3x9x512xf32, #tpu.memory_space<vmem>>, vector<1x9x512xf32>
    %143 = vector.shape_cast %142 : vector<1x9x512xf32> to vector<9x512xf32>
    %144 = arith.mulf %143, %136 : vector<9x512xf32>
    %cst_77 = arith.constant dense<0.000000e+00> : vector<512xf32>
    %145 = vector.multi_reduction <add>, %144, %cst_77 [0] : vector<9x512xf32> to vector<512xf32>
    %146 = vector.shape_cast %145 : vector<512xf32> to vector<1x512xf32>
    %c2 = arith.constant 2 : index
    %c0_78 = arith.constant 0 : index
    %c0_79 = arith.constant 0 : index
    %147 = vector.load %arg2[%c2, %c0_78, %c0_79] : memref<3x9x512xf32, #tpu.memory_space<vmem>>, vector<1x9x512xf32>
    %148 = vector.shape_cast %147 : vector<1x9x512xf32> to vector<9x512xf32>
    %149 = arith.mulf %148, %136 : vector<9x512xf32>
    %cst_80 = arith.constant dense<0.000000e+00> : vector<512xf32>
    %150 = vector.multi_reduction <add>, %149, %cst_80 [0] : vector<9x512xf32> to vector<512xf32>
    %151 = vector.shape_cast %150 : vector<512xf32> to vector<1x512xf32>
    %152 = tpu.concatenate %141, %146, %151 in 0 : vector<1x512xf32>, vector<1x512xf32>, vector<1x512xf32> -> vector<3x512xf32>
    %153 = vector.extract_strided_slice %136 {offsets = [0, 0], sizes = [9, 256], strides = [1, 1]} : vector<9x512xf32> to vector<9x256xf32>
    %c0_81 = arith.constant 0 : index
    %c0_82 = arith.constant 0 : index
    %c0_83 = arith.constant 0 : index
    %154 = vector.load %arg14[%c0_81, %c0_82, %c0_83] : memref<2x9x256xf32, #tpu.memory_space<vmem>>, vector<1x9x256xf32>
    %155 = vector.shape_cast %154 : vector<1x9x256xf32> to vector<9x256xf32>
    %156 = vector.shape_cast %153 : vector<9x256xf32> to vector<1x9x256xf32>
    tpu.vector_store %arg14[%c0_81, %c0_82, %c0_83], %156 {strides = array<i32>} : memref<2x9x256xf32, #tpu.memory_space<vmem>>, vector<1x9x256xf32>,
    %157 = vector.extract_strided_slice %152 {offsets = [0, 0], sizes = [3, 256], strides = [1, 1]} : vector<3x512xf32> to vector<3x256xf32>
    %c0_84 = arith.constant 0 : index
    %c0_85 = arith.constant 0 : index
    %c0_86 = arith.constant 0 : index
    %158 = vector.load %arg15[%c0_84, %c0_85, %c0_86] : memref<2x3x256xf32, #tpu.memory_space<vmem>>, vector<1x3x256xf32>
    %159 = vector.shape_cast %158 : vector<1x3x256xf32> to vector<3x256xf32>
    %160 = vector.shape_cast %157 : vector<3x256xf32> to vector<1x3x256xf32>
    tpu.vector_store %arg15[%c0_84, %c0_85, %c0_86], %160 {strides = array<i32>} : memref<2x3x256xf32, #tpu.memory_space<vmem>>, vector<1x3x256xf32>,
    %161 = vector.extract_strided_slice %136 {offsets = [0, 256], sizes = [9, 256], strides = [1, 1]} : vector<9x512xf32> to vector<9x256xf32>
    %c1_87 = arith.constant 1 : index
    %c0_88 = arith.constant 0 : index
    %c0_89 = arith.constant 0 : index
    %162 = vector.load %arg14[%c1_87, %c0_88, %c0_89] : memref<2x9x256xf32, #tpu.memory_space<vmem>>, vector<1x9x256xf32>
    %163 = vector.shape_cast %162 : vector<1x9x256xf32> to vector<9x256xf32>
    %164 = vector.shape_cast %161 : vector<9x256xf32> to vector<1x9x256xf32>
    tpu.vector_store %arg14[%c1_87, %c0_88, %c0_89], %164 {strides = array<i32>} : memref<2x9x256xf32, #tpu.memory_space<vmem>>, vector<1x9x256xf32>,
    %165 = vector.extract_strided_slice %152 {offsets = [0, 256], sizes = [3, 256], strides = [1, 1]} : vector<3x512xf32> to vector<3x256xf32>
    %c1_90 = arith.constant 1 : index
    %c0_91 = arith.constant 0 : index
    %c0_92 = arith.constant 0 : index
    %166 = vector.load %arg15[%c1_90, %c0_91, %c0_92] : memref<2x3x256xf32, #tpu.memory_space<vmem>>, vector<1x3x256xf32>
    %167 = vector.shape_cast %166 : vector<1x3x256xf32> to vector<3x256xf32>
    %168 = vector.shape_cast %165 : vector<3x256xf32> to vector<1x3x256xf32>
    tpu.vector_store %arg15[%c1_90, %c0_91, %c0_92], %168 {strides = array<i32>} : memref<2x3x256xf32, #tpu.memory_space<vmem>>, vector<1x3x256xf32>,
    return
  }
}

</mosaic_0001>

<llo_original>
// kernel: kernel_model_forward.1
$region0: #{kernel_model_forward.1}
  #allocation0 [shape = 'u32[]', space=smem, size = 0x4, offset = 0x4, fixed_abs, tag = 'smem constant byte address 0x4 - core index']
  #allocation1 [shape = 'u32[144,128]{1,0:T(1,128)}', space=vmem, size = 0x12000, scoped, tag = 'internal scratch']
  %s0 = inlined_call_operand.vmem [shape: f32[3,512], index: 0, kind: input, shape index: {}]
  %s1 = inlined_call_operand.vmem [shape: f32[4,2], index: 1, kind: input, shape index: {}]
  %s2 = inlined_call_operand.vmem [shape: f32[3,9,512], index: 2, kind: input, shape index: {}]
  %s3 = inlined_call_operand.vmem [shape: bf16[32,3], index: 3, kind: input, shape index: {}]
  %s4 = inlined_call_operand.vmem [shape: bf16[32,4], index: 4, kind: input, shape index: {}]
  %s5 = inlined_call_operand.vmem [shape: f32[32,1], index: 5, kind: input, shape index: {}]
  %s6 = inlined_call_operand.vmem [shape: f32[32,1], index: 6, kind: input, shape index: {}]
  %s7 = inlined_call_operand.vmem [shape: bf16[2,32,32], index: 7, kind: input, shape index: {}]
  %s8 = inlined_call_operand.vmem [shape: f32[2,32,1], index: 8, kind: input, shape index: {}]
  %s9 = inlined_call_operand.vmem [shape: f32[2,32,1], index: 9, kind: input, shape index: {}]
  %s10 = inlined_call_operand.vmem [shape: bf16[2,32,32], index: 10, kind: input, shape index: {}]
  %s11 = inlined_call_operand.vmem [shape: f32[2,32,1], index: 11, kind: input, shape index: {}]
  %s12 = inlined_call_operand.vmem [shape: bf16[9,32], index: 12, kind: input, shape index: {}]
  %s13 = inlined_call_operand.vmem [shape: f32[9,1], index: 13, kind: input, shape index: {}]
  %s14 = inlined_call_operand.vmem [shape: f32[2,9,256], index: 14, kind: output, shape index: {0}]
  %s15 = inlined_call_operand.vmem [shape: f32[2,3,256], index: 15, kind: output, shape index: {1}]
  %16 = xla_tuple %s14, %s15
  %s17 = sld [smem:[#allocation0]]
  $region74: #{kernel_model_forward.1} parent=0
    _
  %s19 = ssub.s32 1, %s17
  %s20 = scalar_select 0, %s19, %s17
  // Predicated region
  $region2: #{kernel_model_forward.1} parent=0 // pred_check
    _
  $region3: #{kernel_model_forward.1} parent=0 // pred_check_branch
    %22 = sbr.rel (0) target = $region5
  $region4: #{kernel_model_forward.1} parent=0 // pred_region
    _
  $region5: #{kernel_model_forward.1} parent=0 // pred_fallthru
    _
  // Predicated region
  $region6: #{kernel_model_forward.1} parent=0 // pred_check
    _
  $region7: #{kernel_model_forward.1} parent=0 // pred_check_branch
    %24 = sbr.rel (0) target = $region9
  $region8: #{kernel_model_forward.1} parent=0 // pred_region
    _
  $region9: #{kernel_model_forward.1} parent=0 // pred_fallthru
    _
  // Predicated region
  $region10: #{kernel_model_forward.1} parent=0 // pred_check
    _
  $region11: #{kernel_model_forward.1} parent=0 // pred_check_branch
    %26 = sbr.rel (0) target = $region13
  $region12: #{kernel_model_forward.1} parent=0 // pred_region
    _
  $region13: #{kernel_model_forward.1} parent=0 // pred_fallthru
    _
  // Predicated region
  $region14: #{kernel_model_forward.1} parent=0 // pred_check
    _
  $region15: #{kernel_model_forward.1} parent=0 // pred_check_branch
    %28 = sbr.rel (0) target = $region17
  $region16: #{kernel_model_forward.1} parent=0 // pred_region
    _
  $region17: #{kernel_model_forward.1} parent=0 // pred_fallthru
    _
  // Predicated region
  $region18: #{kernel_model_forward.1} parent=0 // pred_check
    _
  $region19: #{kernel_model_forward.1} parent=0 // pred_check_branch
    %30 = sbr.rel (0) target = $region21
  $region20: #{kernel_model_forward.1} parent=0 // pred_region
    _
  $region21: #{kernel_model_forward.1} parent=0 // pred_fallthru
    _
  // Predicated region
  $region22: #{kernel_model_forward.1} parent=0 // pred_check
    _
  $region23: #{kernel_model_forward.1} parent=0 // pred_check_branch
    %32 = sbr.rel (0) target = $region25
  $region24: #{kernel_model_forward.1} parent=0 // pred_region
    _
  $region25: #{kernel_model_forward.1} parent=0 // pred_fallthru
    _
  // Predicated region
  $region26: #{kernel_model_forward.1} parent=0 // pred_check
    _
  $region27: #{kernel_model_forward.1} parent=0 // pred_check_branch
    %34 = sbr.rel (0) target = $region29
  $region28: #{kernel_model_forward.1} parent=0 // pred_region
    _
  $region29: #{kernel_model_forward.1} parent=0 // pred_fallthru
    _
  // Predicated region
  $region30: #{kernel_model_forward.1} parent=0 // pred_check
    _
  $region31: #{kernel_model_forward.1} parent=0 // pred_check_branch
    %36 = sbr.rel (0) target = $region33
  $region32: #{kernel_model_forward.1} parent=0 // pred_region
    _
  $region33: #{kernel_model_forward.1} parent=0 // pred_fallthru
    _
  // Predicated region
  $region34: #{kernel_model_forward.1} parent=0 // pred_check
    _
  $region35: #{kernel_model_forward.1} parent=0 // pred_check_branch
    %38 = sbr.rel (0) target = $region37
  $region36: #{kernel_model_forward.1} parent=0 // pred_region
    _
  $region37: #{kernel_model_forward.1} parent=0 // pred_fallthru
    _
  // Predicated region
  $region38: #{kernel_model_forward.1} parent=0 // pred_check
    _
  $region39: #{kernel_model_forward.1} parent=0 // pred_check_branch
    %40 = sbr.rel (0) target = $region41
  $region40: #{kernel_model_forward.1} parent=0 // pred_region
    _
  $region41: #{kernel_model_forward.1} parent=0 // pred_fallthru
    _
  // Predicated region
  $region42: #{kernel_model_forward.1} parent=0 // pred_check
    _
  $region43: #{kernel_model_forward.1} parent=0 // pred_check_branch
    %42 = sbr.rel (0) target = $region45
  $region44: #{kernel_model_forward.1} parent=0 // pred_region
    _
  $region45: #{kernel_model_forward.1} parent=0 // pred_fallthru
    _
  // Predicated region
  $region46: #{kernel_model_forward.1} parent=0 // pred_check
    _
  $region47: #{kernel_model_forward.1} parent=0 // pred_check_branch
    %44 = sbr.rel (0) target = $region49
  $region48: #{kernel_model_forward.1} parent=0 // pred_region
    _
  $region49: #{kernel_model_forward.1} parent=0 // pred_fallthru
    _
  // Predicated region
  $region50: #{kernel_model_forward.1} parent=0 // pred_check
    _
  $region51: #{kernel_model_forward.1} parent=0 // pred_check_branch
    %46 = sbr.rel (0) target = $region53
  $region52: #{kernel_model_forward.1} parent=0 // pred_region
    _
  $region53: #{kernel_model_forward.1} parent=0 // pred_fallthru
    _
  // Predicated region
  $region54: #{kernel_model_forward.1} parent=0 // pred_check
    _
  $region55: #{kernel_model_forward.1} parent=0 // pred_check_branch
    %48 = sbr.rel (0) target = $region57
  $region56: #{kernel_model_forward.1} parent=0 // pred_region
    _
  $region57: #{kernel_model_forward.1} parent=0 // pred_fallthru
    _
  %v50 = vld [vmem:[%s0] sm:$0x77]
  %v51 = vld [vmem:[%s0 + $0x8] sm:$0x77]
  %v52 = vld [vmem:[%s1] sm:$0xf]
  %54 = vset.pattern.permute.xlu0 0
  %55 = vperm.xlu0 %54, %v52
  %v56 = vpop.permute.xlu0 %55
  %58 = vset.pattern.permute.xlu0 1
  %59 = vperm.xlu0 %58, %v52
  %v60 = vpop.permute.xlu0 %59
  %v62 = vld [vmem:[%s3] sm:$0xf]
  %v63 = vld [vmem:[%s3 + $0x4] sm:$0xf]
  %v64 = vld [vmem:[%s3 + $0x8] sm:$0xf]
  %v65 = vld [vmem:[%s3 + $0xc] sm:$0xf]
  %v68 = vcombine.high %v50, %v50
  %v69 = vcombine.high %v51, %v51
  %v72 = vpack.c.bf16 %v50, %v50
  %v73 = vpack.c.bf16 %v68, %v68
  %v74 = vpack.c.bf16 %v51, %v51
  %v75 = vpack.c.bf16 %v69, %v69
  %v76 = vld [vmem:[%s4] sm:$0xf]
  %v77 = vld [vmem:[%s4 + $0x4] sm:$0xf]
  %v78 = vld [vmem:[%s4 + $0x8] sm:$0xf]
  %v79 = vld [vmem:[%s4 + $0xc] sm:$0xf]
  %v80 = vpack.c.bf16 %v56, %v56
  %v81 = vpack.c.bf16 %v60, %v60
  %v86 = vunpack.c.l.b16 %v76
  %v87 = vunpack.c.l.b16 %v77
  %v88 = vunpack.c.l.b16 %v78
  %v89 = vunpack.c.l.b16 %v79
  %v90 = vpack.c.b16 %v87, %v86
  %v91 = vpack.c.b16 %v89, %v88
  %vm92 = vcmask 31744
  %v94 = vsel %vm92, %v90, 0
  %v97 = vsel %vm92, %v91, 0
  %vm99 = vcmask 1041408
  %v101 = vsel %vm99, %v80, 0
  %v104 = vsel %vm99, %v81, 0
  %106 = vmatprep.subr.bf16.mxu0 %v101
  %107 = vmatpush1.bf16.msra.mxu0 %v101
  %108 = vmatprep.subr.bf16.mxu0 0
  %109 = vmatpush1.bf16.msra.mxu0 0
  %110 = vmatprep.subr.bf16.mxu0 0
  %111 = vmatpush1.bf16.msra.mxu0 0
  %112 = vmatprep.subr.bf16.mxu0 0
  %113 = vmatpush1.bf16.msra.mxu0 0
  %114 = vmatprep.subr.bf16.mxu0 0
  %115 = vmatpush1.bf16.msra.mxu0 0
  %116 = vmatprep.subr.bf16.mxu0 0
  %117 = vmatpush1.bf16.msra.mxu0 0
  %118 = vmatprep.subr.bf16.mxu0 0
  %119 = vmatpush1.bf16.msra.mxu0 0
  %120 = vmatprep.subr.bf16.mxu0 0
  %121 = vmatpush1.bf16.msra.mxu0 0
  %122 = vmatprep.subr.bf16.mxu0 0
  %123 = vmatpush1.bf16.msra.mxu0 0
  %124 = vmatprep.subr.bf16.mxu0 0
  %125 = vmatpush1.bf16.msra.mxu0 0
  %126 = vmatprep.subr.bf16.mxu0 0
  %127 = vmatpush1.bf16.msra.mxu0 0
  %128 = vmatprep.subr.bf16.mxu0 0
  %129 = vmatpush1.bf16.msra.mxu0 0
  %130 = vmatprep.subr.bf16.mxu0 0
  %131 = vmatpush1.bf16.msra.mxu0 0
  %132 = vmatprep.subr.bf16.mxu0 0
  %133 = vmatpush1.bf16.msra.mxu0 0
  %134 = vmatprep.subr.bf16.mxu0 0
  %135 = vmatpush1.bf16.msra.mxu0 0
  %136 = vmatprep.subr.bf16.mxu0 0
  %137 = vmatpush1.bf16.msra.mxu0 0
  %138 = vmatprep.mubr.bf16.mxu0 0
  %139 = vmatmul.mubr.bf16.gmra.mrb[0].mxu0 %v94
  %v140 = vpop.f32.mrb[0].mxu0
  %v141 = vadd.f32 0.0, %v140
  %v142 = vpop.f32.mrb[0].mxu0
  %v143 = vadd.f32 0.0, %v142
  %v144 = vpop.f32.mrb[0].mxu0
  %v145 = vadd.f32 0.0, %v144
  %v146 = vpop.f32.mrb[0].mxu0
  %v147 = vadd.f32 0.0, %v146
  %148 = vmatprep.mubr.bf16.mxu0 0
  %149 = vmatmul.mubr.bf16.gmra.mrb[0].mxu0 %v97
  %v150 = vpop.f32.mrb[0].mxu0
  %v151 = vadd.f32 0.0, %v150
  %v152 = vpop.f32.mrb[0].mxu0
  %v153 = vadd.f32 0.0, %v152
  %v154 = vpop.f32.mrb[0].mxu0
  %v155 = vadd.f32 0.0, %v154
  %v156 = vpop.f32.mrb[0].mxu0
  %v157 = vadd.f32 0.0, %v156
  %158 = vdwg.mxu0
  %159 = vmatprep.subr.bf16.mxu0 %v104
  %160 = vmatpush1.bf16.msra.mxu0 %v104
  %161 = vmatprep.subr.bf16.mxu0 0
  %162 = vmatpush1.bf16.msra.mxu0 0
  %163 = vmatprep.subr.bf16.mxu0 0
  %164 = vmatpush1.bf16.msra.mxu0 0
  %165 = vmatprep.subr.bf16.mxu0 0
  %166 = vmatpush1.bf16.msra.mxu0 0
  %167 = vmatprep.subr.bf16.mxu0 0
  %168 = vmatpush1.bf16.msra.mxu0 0
  %169 = vmatprep.subr.bf16.mxu0 0
  %170 = vmatpush1.bf16.msra.mxu0 0
  %171 = vmatprep.subr.bf16.mxu0 0
  %172 = vmatpush1.bf16.msra.mxu0 0
  %173 = vmatprep.subr.bf16.mxu0 0
  %174 = vmatpush1.bf16.msra.mxu0 0
  %175 = vmatprep.subr.bf16.mxu0 0
  %176 = vmatpush1.bf16.msra.mxu0 0
  %177 = vmatprep.subr.bf16.mxu0 0
  %178 = vmatpush1.bf16.msra.mxu0 0
  %179 = vmatprep.subr.bf16.mxu0 0
  %180 = vmatpush1.bf16.msra.mxu0 0
  %181 = vmatprep.subr.bf16.mxu0 0
  %182 = vmatpush1.bf16.msra.mxu0 0
  %183 = vmatprep.subr.bf16.mxu0 0
  %184 = vmatpush1.bf16.msra.mxu0 0
  %185 = vmatprep.subr.bf16.mxu0 0
  %186 = vmatpush1.bf16.msra.mxu0 0
  %187 = vmatprep.subr.bf16.mxu0 0
  %188 = vmatpush1.bf16.msra.mxu0 0
  %189 = vmatprep.subr.bf16.mxu0 0
  %190 = vmatpush1.bf16.msra.mxu0 0
  %191 = vmatprep.mubr.bf16.mxu0 0
  %192 = vmatmul.mubr.bf16.gmra.mrb[0].mxu0 %v94
  %v193 = vpop.f32.mrb[0].mxu0
  %v194 = vadd.f32 0.0, %v193
  %v195 = vpop.f32.mrb[0].mxu0
  %v196 = vadd.f32 0.0, %v195
  %v197 = vpop.f32.mrb[0].mxu0
  %v198 = vadd.f32 0.0, %v197
  %v199 = vpop.f32.mrb[0].mxu0
  %v200 = vadd.f32 0.0, %v199
  %201 = vmatprep.mubr.bf16.mxu0 0
  %202 = vmatmul.mubr.bf16.gmra.mrb[0].mxu0 %v97
  %v203 = vpop.f32.mrb[0].mxu0
  %v204 = vadd.f32 0.0, %v203
  %v205 = vpop.f32.mrb[0].mxu0
  %v206 = vadd.f32 0.0, %v205
  %v207 = vpop.f32.mrb[0].mxu0
  %v208 = vadd.f32 0.0, %v207
  %v209 = vpop.f32.mrb[0].mxu0
  %v210 = vadd.f32 0.0, %v209
  %211 = vdwg.mxu0
  %v216 = vunpack.c.l.b16 %v62
  %v217 = vunpack.c.l.b16 %v63
  %v218 = vunpack.c.l.b16 %v64
  %v219 = vunpack.c.l.b16 %v65
  %v220 = vpack.c.b16 %v217, %v216
  %v221 = vpack.c.b16 %v219, %v218
  %vm222 = vcmask 23552
  %v224 = vsel %vm222, %v220, 0
  %v227 = vsel %vm222, %v221, 0
  %vm229 = vcmask 1040384
  %v230 = vsel %vm229, 4294967295, 65535
  %v231 = vsel %vm99, %v230, 0
  %v233 = vand.u32 %v72, %v231
  %v236 = vand.u32 %v73, %v231
  %v239 = vand.u32 %v74, %v231
  %v242 = vand.u32 %v75, %v231
  %244 = vmatprep.subr.bf16.mxu0 %v236
  %245 = vmatpush1.bf16.msra.mxu0 %v233
  %246 = vmatprep.subr.bf16.mxu0 0
  %247 = vmatpush1.bf16.msra.mxu0 0
  %248 = vmatprep.subr.bf16.mxu0 0
  %249 = vmatpush1.bf16.msra.mxu0 0
  %250 = vmatprep.subr.bf16.mxu0 0
  %251 = vmatpush1.bf16.msra.mxu0 0
  %252 = vmatprep.subr.bf16.mxu0 0
  %253 = vmatpush1.bf16.msra.mxu0 0
  %254 = vmatprep.subr.bf16.mxu0 0
  %255 = vmatpush1.bf16.msra.mxu0 0
  %256 = vmatprep.subr.bf16.mxu0 0
  %257 = vmatpush1.bf16.msra.mxu0 0
  %258 = vmatprep.subr.bf16.mxu0 0
  %259 = vmatpush1.bf16.msra.mxu0 0
  %260 = vmatprep.subr.bf16.mxu0 0
  %261 = vmatpush1.bf16.msra.mxu0 0
  %262 = vmatprep.subr.bf16.mxu0 0
  %263 = vmatpush1.bf16.msra.mxu0 0
  %264 = vmatprep.subr.bf16.mxu0 0
  %265 = vmatpush1.bf16.msra.mxu0 0
  %266 = vmatprep.subr.bf16.mxu0 0
  %267 = vmatpush1.bf16.msra.mxu0 0
  %268 = vmatprep.subr.bf16.mxu0 0
  %269 = vmatpush1.bf16.msra.mxu0 0
  %270 = vmatprep.subr.bf16.mxu0 0
  %271 = vmatpush1.bf16.msra.mxu0 0
  %272 = vmatprep.subr.bf16.mxu0 0
  %273 = vmatpush1.bf16.msra.mxu0 0
  %274 = vmatprep.subr.bf16.mxu0 0
  %275 = vmatpush1.bf16.msra.mxu0 0
  %276 = vmatprep.mubr.bf16.mxu0 0
  %277 = vmatmul.mubr.bf16.gmra.mrb[0].mxu0 %v224
  %v278 = vpop.f32.mrb[0].mxu0
  %v279 = vadd.f32 %v141, %v278
  %v280 = vpop.f32.mrb[0].mxu0
  %v281 = vadd.f32 %v143, %v280
  %v282 = vpop.f32.mrb[0].mxu0
  %v283 = vadd.f32 %v145, %v282
  %v284 = vpop.f32.mrb[0].mxu0
  %v285 = vadd.f32 %v147, %v284
  %286 = vmatprep.mubr.bf16.mxu0 0
  %287 = vmatmul.mubr.bf16.gmra.mrb[0].mxu0 %v227
  %v288 = vpop.f32.mrb[0].mxu0
  %v289 = vadd.f32 %v151, %v288
  %v290 = vpop.f32.mrb[0].mxu0
  %v291 = vadd.f32 %v153, %v290
  %v292 = vpop.f32.mrb[0].mxu0
  %v293 = vadd.f32 %v155, %v292
  %v294 = vpop.f32.mrb[0].mxu0
  %v295 = vadd.f32 %v157, %v294
  %296 = vdwg.mxu0
  %297 = vmatprep.subr.bf16.mxu0 %v242
  %298 = vmatpush1.bf16.msra.mxu0 %v239
  %299 = vmatprep.subr.bf16.mxu0 0
  %300 = vmatpush1.bf16.msra.mxu0 0
  %301 = vmatprep.subr.bf16.mxu0 0
  %302 = vmatpush1.bf16.msra.mxu0 0
  %303 = vmatprep.subr.bf16.mxu0 0
  %304 = vmatpush1.bf16.msra.mxu0 0
  %305 = vmatprep.subr.bf16.mxu0 0
  %306 = vmatpush1.bf16.msra.mxu0 0
  %307 = vmatprep.subr.bf16.mxu0 0
  %308 = vmatpush1.bf16.msra.mxu0 0
  %309 = vmatprep.subr.bf16.mxu0 0
  %310 = vmatpush1.bf16.msra.mxu0 0
  %311 = vmatprep.subr.bf16.mxu0 0
  %312 = vmatpush1.bf16.msra.mxu0 0
  %313 = vmatprep.subr.bf16.mxu0 0
  %314 = vmatpush1.bf16.msra.mxu0 0
  %315 = vmatprep.subr.bf16.mxu0 0
  %316 = vmatpush1.bf16.msra.mxu0 0
  %317 = vmatprep.subr.bf16.mxu0 0
  %318 = vmatpush1.bf16.msra.mxu0 0
  %319 = vmatprep.subr.bf16.mxu0 0
  %320 = vmatpush1.bf16.msra.mxu0 0
  %321 = vmatprep.subr.bf16.mxu0 0
  %322 = vmatpush1.bf16.msra.mxu0 0
  %323 = vmatprep.subr.bf16.mxu0 0
  %324 = vmatpush1.bf16.msra.mxu0 0
  %325 = vmatprep.subr.bf16.mxu0 0
  %326 = vmatpush1.bf16.msra.mxu0 0
  %327 = vmatprep.subr.bf16.mxu0 0
  %328 = vmatpush1.bf16.msra.mxu0 0
  %329 = vmatprep.mubr.bf16.mxu0 0
  %330 = vmatmul.mubr.bf16.gmra.mrb[0].mxu0 %v224
  %v331 = vpop.f32.mrb[0].mxu0
  %v332 = vadd.f32 %v194, %v331
  %v333 = vpop.f32.mrb[0].mxu0
  %v334 = vadd.f32 %v196, %v333
  %v335 = vpop.f32.mrb[0].mxu0
  %v336 = vadd.f32 %v198, %v335
  %v337 = vpop.f32.mrb[0].mxu0
  %v338 = vadd.f32 %v200, %v337
  %339 = vmatprep.mubr.bf16.mxu0 0
  %340 = vmatmul.mubr.bf16.gmra.mrb[0].mxu0 %v227
  %v341 = vpop.f32.mrb[0].mxu0
  %v342 = vadd.f32 %v204, %v341
  %v343 = vpop.f32.mrb[0].mxu0
  %v344 = vadd.f32 %v206, %v343
  %v345 = vpop.f32.mrb[0].mxu0
  %v346 = vadd.f32 %v208, %v345
  %v347 = vpop.f32.mrb[0].mxu0
  %v348 = vadd.f32 %v210, %v347
  %349 = vdwg.mxu0
  %v350 = vld [vmem:[%s5] sm:$0xff]
  %v351 = vld [vmem:[%s5 + $0x8] sm:$0xff]
  %v352 = vld [vmem:[%s5 + $0x10] sm:$0xff]
  %v353 = vld [vmem:[%s5 + $0x18] sm:$0xff]
  %v354 = vld [vmem:[%s6] sm:$0xff]
  %v355 = vld [vmem:[%s6 + $0x8] sm:$0xff]
  %v356 = vld [vmem:[%s6 + $0x10] sm:$0xff]
  %v357 = vld [vmem:[%s6 + $0x18] sm:$0xff]
  %v358 = vadd.f32 %v279, %v281
  %v359 = vadd.f32 %v358, %v332
  %v360 = vadd.f32 %v359, %v334
  %361 = vadd.xlane.f32.xlu0 %v360
  %v362 = vpop.xlane.xlu0 %361
  %v363 = vadd.f32 %v283, %v285
  %v364 = vadd.f32 %v363, %v336
  %v365 = vadd.f32 %v364, %v338
  %366 = vadd.xlane.f32.xlu0 %v365
  %v367 = vpop.xlane.xlu0 %366
  %v368 = vadd.f32 %v289, %v291
  %v369 = vadd.f32 %v368, %v342
  %v370 = vadd.f32 %v369, %v344
  %371 = vadd.xlane.f32.xlu0 %v370
  %v372 = vpop.xlane.xlu0 %371
  %v373 = vadd.f32 %v293, %v295
  %v374 = vadd.f32 %v373, %v346
  %v375 = vadd.f32 %v374, %v348
  %376 = vadd.xlane.f32.xlu0 %v375
  %v377 = vpop.xlane.xlu0 %376
  %v378 = vmul.f32 %v279, %v279
  %v379 = vmul.f32 %v281, %v281
  %v380 = vmul.f32 %v332, %v332
  %v381 = vmul.f32 %v334, %v334
  %v382 = vmul.f32 %v283, %v283
  %v383 = vmul.f32 %v285, %v285
  %v384 = vmul.f32 %v336, %v336
  %v385 = vmul.f32 %v338, %v338
  %v386 = vmul.f32 %v289, %v289
  %v387 = vmul.f32 %v291, %v291
  %v388 = vmul.f32 %v342, %v342
  %v389 = vmul.f32 %v344, %v344
  %v390 = vmul.f32 %v293, %v293
  %v391 = vmul.f32 %v295, %v295
  %v392 = vmul.f32 %v346, %v346
  %v393 = vmul.f32 %v348, %v348
  %v394 = vadd.f32 %v378, %v379
  %v395 = vadd.f32 %v394, %v380
  %v396 = vadd.f32 %v395, %v381
  %397 = vadd.xlane.f32.xlu0 %v396
  %v398 = vpop.xlane.xlu0 %397
  %v399 = vadd.f32 %v382, %v383
  %v400 = vadd.f32 %v399, %v384
  %v401 = vadd.f32 %v400, %v385
  %402 = vadd.xlane.f32.xlu0 %v401
  %v403 = vpop.xlane.xlu0 %402
  %v404 = vadd.f32 %v386, %v387
  %v405 = vadd.f32 %v404, %v388
  %v406 = vadd.f32 %v405, %v389
  %407 = vadd.xlane.f32.xlu0 %v406
  %v408 = vpop.xlane.xlu0 %407
  %v409 = vadd.f32 %v390, %v391
  %v410 = vadd.f32 %v409, %v392
  %v411 = vadd.f32 %v410, %v393
  %412 = vadd.xlane.f32.xlu0 %v411
  %v413 = vpop.xlane.xlu0 %412
  %v414 = vmul.f32 %v362, 0.001953125
  %v415 = vmul.f32 %v367, 0.001953125
  %v416 = vmul.f32 %v372, 0.001953125
  %v417 = vmul.f32 %v377, 0.001953125
  %v418 = vmul.f32 %v398, 0.001953125
  %v419 = vmul.f32 %v403, 0.001953125
  %v420 = vmul.f32 %v408, 0.001953125
  %v421 = vmul.f32 %v413, 0.001953125
  %v422 = vmul.f32 %v414, %v414
  %v423 = vmul.f32 %v415, %v415
  %v424 = vmul.f32 %v416, %v416
  %v425 = vmul.f32 %v417, %v417
  %v426 = vsub.f32 %v418, %v422
  %v427 = vsub.f32 %v419, %v423
  %v428 = vsub.f32 %v420, %v424
  %v429 = vsub.f32 %v421, %v425
  %v430 = vadd.f32 %v426, 1e-05
  %v431 = vadd.f32 %v427, 1e-05
  %v432 = vadd.f32 %v428, 1e-05
  %v433 = vadd.f32 %v429, 1e-05
  %v434 = vrsqrt.pop %v430
  %v435 = vrsqrt.pop %v431
  %v436 = vrsqrt.pop %v432
  %v437 = vrsqrt.pop %v433
  %v438 = vmul.f32 %v350, %v434
  %v439 = vmul.f32 %v351, %v435
  %v440 = vmul.f32 %v352, %v436
  %v441 = vmul.f32 %v353, %v437
  %v442 = vsub.f32 %v279, %v414
  %v443 = vsub.f32 %v281, %v414
  %v444 = vsub.f32 %v332, %v414
  %v445 = vsub.f32 %v334, %v414
  %v446 = vsub.f32 %v283, %v415
  %v447 = vsub.f32 %v285, %v415
  %v448 = vsub.f32 %v336, %v415
  %v449 = vsub.f32 %v338, %v415
  %v450 = vsub.f32 %v289, %v416
  %v451 = vsub.f32 %v291, %v416
  %v452 = vsub.f32 %v342, %v416
  %v453 = vsub.f32 %v344, %v416
  %v454 = vsub.f32 %v293, %v417
  %v455 = vsub.f32 %v295, %v417
  %v456 = vsub.f32 %v346, %v417
  %v457 = vsub.f32 %v348, %v417
  %459 = vset.pattern.permute.xlu0 0
  %460 = vperm.xlu0 %459, %v438
  %v461 = vpop.permute.xlu0 %460
  %464 = vset.pattern.permute.xlu0 0
  %465 = vperm.xlu0 %464, %v439
  %v466 = vpop.permute.xlu0 %465
  %469 = vset.pattern.permute.xlu0 0
  %470 = vperm.xlu0 %469, %v440
  %v471 = vpop.permute.xlu0 %470
  %474 = vset.pattern.permute.xlu0 0
  %475 = vperm.xlu0 %474, %v441
  %v476 = vpop.permute.xlu0 %475
  %v478 = vmul.f32 %v442, %v461
  %v479 = vmul.f32 %v443, %v461
  %v480 = vmul.f32 %v444, %v461
  %v481 = vmul.f32 %v445, %v461
  %v482 = vmul.f32 %v446, %v466
  %v483 = vmul.f32 %v447, %v466
  %v484 = vmul.f32 %v448, %v466
  %v485 = vmul.f32 %v449, %v466
  %v486 = vmul.f32 %v450, %v471
  %v487 = vmul.f32 %v451, %v471
  %v488 = vmul.f32 %v452, %v471
  %v489 = vmul.f32 %v453, %v471
  %v490 = vmul.f32 %v454, %v476
  %v491 = vmul.f32 %v455, %v476
  %v492 = vmul.f32 %v456, %v476
  %v493 = vmul.f32 %v457, %v476
  %495 = vset.pattern.permute.xlu0 0
  %496 = vperm.xlu0 %495, %v354
  %v497 = vpop.permute.xlu0 %496
  %500 = vset.pattern.permute.xlu0 0
  %501 = vperm.xlu0 %500, %v355
  %v502 = vpop.permute.xlu0 %501
  %505 = vset.pattern.permute.xlu0 0
  %506 = vperm.xlu0 %505, %v356
  %v507 = vpop.permute.xlu0 %506
  %510 = vset.pattern.permute.xlu0 0
  %511 = vperm.xlu0 %510, %v357
  %v512 = vpop.permute.xlu0 %511
  %v514 = vadd.f32 %v478, %v497
  %v515 = vadd.f32 %v479, %v497
  %v516 = vadd.f32 %v480, %v497
  %v517 = vadd.f32 %v481, %v497
  %v518 = vadd.f32 %v482, %v502
  %v519 = vadd.f32 %v483, %v502
  %v520 = vadd.f32 %v484, %v502
  %v521 = vadd.f32 %v485, %v502
  %v522 = vadd.f32 %v486, %v507
  %v523 = vadd.f32 %v487, %v507
  %v524 = vadd.f32 %v488, %v507
  %v525 = vadd.f32 %v489, %v507
  %v526 = vadd.f32 %v490, %v512
  %v527 = vadd.f32 %v491, %v512
  %v528 = vadd.f32 %v492, %v512
  %v529 = vadd.f32 %v493, %v512
  %v530 = vmax.f32 %v514, 0.0
  %v531 = vmax.f32 %v515, 0.0
  %v532 = vmax.f32 %v516, 0.0
  %v533 = vmax.f32 %v517, 0.0
  %v534 = vmax.f32 %v518, 0.0
  %v535 = vmax.f32 %v519, 0.0
  %v536 = vmax.f32 %v520, 0.0
  %v537 = vmax.f32 %v521, 0.0
  %v538 = vmax.f32 %v522, 0.0
  %v539 = vmax.f32 %v523, 0.0
  %v540 = vmax.f32 %v524, 0.0
  %v541 = vmax.f32 %v525, 0.0
  %v542 = vmax.f32 %v526, 0.0
  %v543 = vmax.f32 %v527, 0.0
  %v544 = vmax.f32 %v528, 0.0
  %v545 = vmax.f32 %v529, 0.0
  %v546 = vld [vmem:[%s7] sm:$0xf]
  %v547 = vld [vmem:[%s7 + $0x4] sm:$0xf]
  %v548 = vld [vmem:[%s7 + $0x8] sm:$0xf]
  %v549 = vld [vmem:[%s7 + $0xc] sm:$0xf]
  %v550 = vpack.c.bf16 %v534, %v530
  %v551 = vpack.c.bf16 %v535, %v531
  %v552 = vpack.c.bf16 %v536, %v532
  %v553 = vpack.c.bf16 %v537, %v533
  %v554 = vpack.c.bf16 %v542, %v538
  %v555 = vpack.c.bf16 %v543, %v539
  %v556 = vpack.c.bf16 %v544, %v540
  %v557 = vpack.c.bf16 %v545, %v541
  %v562 = vunpack.c.l.b16 %v546
  %v563 = vunpack.c.l.b16 %v547
  %v564 = vunpack.c.l.b16 %v548
  %v565 = vunpack.c.l.b16 %v549
  %v566 = vpack.c.b16 %v563, %v562
  %v567 = vpack.c.b16 %v565, %v564
  %vm568 = vcmask 261120
  %v570 = vsel %vm568, %v566, 0
  %v573 = vsel %vm568, %v567, 0
  %575 = vmatprep.subr.bf16.mxu0 %v551
  %576 = vmatpush1.bf16.msra.mxu0 %v550
  %577 = vmatprep.subr.bf16.mxu0 %v555
  %578 = vmatpush1.bf16.msra.mxu0 %v554
  %579 = vmatprep.subr.bf16.mxu0 0
  %580 = vmatpush1.bf16.msra.mxu0 0
  %581 = vmatprep.subr.bf16.mxu0 0
  %582 = vmatpush1.bf16.msra.mxu0 0
  %583 = vmatprep.subr.bf16.mxu0 0
  %584 = vmatpush1.bf16.msra.mxu0 0
  %585 = vmatprep.subr.bf16.mxu0 0
  %586 = vmatpush1.bf16.msra.mxu0 0
  %587 = vmatprep.subr.bf16.mxu0 0
  %588 = vmatpush1.bf16.msra.mxu0 0
  %589 = vmatprep.subr.bf16.mxu0 0
  %590 = vmatpush1.bf16.msra.mxu0 0
  %591 = vmatprep.subr.bf16.mxu0 0
  %592 = vmatpush1.bf16.msra.mxu0 0
  %593 = vmatprep.subr.bf16.mxu0 0
  %594 = vmatpush1.bf16.msra.mxu0 0
  %595 = vmatprep.subr.bf16.mxu0 0
  %596 = vmatpush1.bf16.msra.mxu0 0
  %597 = vmatprep.subr.bf16.mxu0 0
  %598 = vmatpush1.bf16.msra.mxu0 0
  %599 = vmatprep.subr.bf16.mxu0 0
  %600 = vmatpush1.bf16.msra.mxu0 0
  %601 = vmatprep.subr.bf16.mxu0 0
  %602 = vmatpush1.bf16.msra.mxu0 0
  %603 = vmatprep.subr.bf16.mxu0 0
  %604 = vmatpush1.bf16.msra.mxu0 0
  %605 = vmatprep.subr.bf16.mxu0 0
  %606 = vmatpush1.bf16.msra.mxu0 0
  %607 = vmatprep.mubr.bf16.mxu0 0
  %608 = vmatmul.mubr.bf16.gmra.mrb[0].mxu0 %v570
  %v609 = vpop.f32.mrb[0].mxu0
  %v610 = vadd.f32 0.0, %v609
  %v611 = vpop.f32.mrb[0].mxu0
  %v612 = vadd.f32 0.0, %v611
  %v613 = vpop.f32.mrb[0].mxu0
  %v614 = vadd.f32 0.0, %v613
  %v615 = vpop.f32.mrb[0].mxu0
  %v616 = vadd.f32 0.0, %v615
  %617 = vmatprep.mubr.bf16.mxu0 0
  %618 = vmatmul.mubr.bf16.gmra.mrb[0].mxu0 %v573
  %v619 = vpop.f32.mrb[0].mxu0
  %v620 = vadd.f32 0.0, %v619
  %v621 = vpop.f32.mrb[0].mxu0
  %v622 = vadd.f32 0.0, %v621
  %v623 = vpop.f32.mrb[0].mxu0
  %v624 = vadd.f32 0.0, %v623
  %v625 = vpop.f32.mrb[0].mxu0
  %v626 = vadd.f32 0.0, %v625
  %627 = vdwg.mxu0
  %628 = vmatprep.subr.bf16.mxu0 %v553
  %629 = vmatpush1.bf16.msra.mxu0 %v552
  %630 = vmatprep.subr.bf16.mxu0 %v557
  %631 = vmatpush1.bf16.msra.mxu0 %v556
  %632 = vmatprep.subr.bf16.mxu0 0
  %633 = vmatpush1.bf16.msra.mxu0 0
  %634 = vmatprep.subr.bf16.mxu0 0
  %635 = vmatpush1.bf16.msra.mxu0 0
  %636 = vmatprep.subr.bf16.mxu0 0
  %637 = vmatpush1.bf16.msra.mxu0 0
  %638 = vmatprep.subr.bf16.mxu0 0
  %639 = vmatpush1.bf16.msra.mxu0 0
  %640 = vmatprep.subr.bf16.mxu0 0
  %641 = vmatpush1.bf16.msra.mxu0 0
  %642 = vmatprep.subr.bf16.mxu0 0
  %643 = vmatpush1.bf16.msra.mxu0 0
  %644 = vmatprep.subr.bf16.mxu0 0
  %645 = vmatpush1.bf16.msra.mxu0 0
  %646 = vmatprep.subr.bf16.mxu0 0
  %647 = vmatpush1.bf16.msra.mxu0 0
  %648 = vmatprep.subr.bf16.mxu0 0
  %649 = vmatpush1.bf16.msra.mxu0 0
  %650 = vmatprep.subr.bf16.mxu0 0
  %651 = vmatpush1.bf16.msra.mxu0 0
  %652 = vmatprep.subr.bf16.mxu0 0
  %653 = vmatpush1.bf16.msra.mxu0 0
  %654 = vmatprep.subr.bf16.mxu0 0
  %655 = vmatpush1.bf16.msra.mxu0 0
  %656 = vmatprep.subr.bf16.mxu0 0
  %657 = vmatpush1.bf16.msra.mxu0 0
  %658 = vmatprep.subr.bf16.mxu0 0
  %659 = vmatpush1.bf16.msra.mxu0 0
  %660 = vmatprep.mubr.bf16.mxu0 0
  %661 = vmatmul.mubr.bf16.gmra.mrb[0].mxu0 %v570
  %v662 = vpop.f32.mrb[0].mxu0
  %v663 = vadd.f32 0.0, %v662
  %v664 = vpop.f32.mrb[0].mxu0
  %v665 = vadd.f32 0.0, %v664
  %v666 = vpop.f32.mrb[0].mxu0
  %v667 = vadd.f32 0.0, %v666
  %v668 = vpop.f32.mrb[0].mxu0
  %v669 = vadd.f32 0.0, %v668
  %670 = vmatprep.mubr.bf16.mxu0 0
  %671 = vmatmul.mubr.bf16.gmra.mrb[0].mxu0 %v573
  %v672 = vpop.f32.mrb[0].mxu0
  %v673 = vadd.f32 0.0, %v672
  %v674 = vpop.f32.mrb[0].mxu0
  %v675 = vadd.f32 0.0, %v674
  %v676 = vpop.f32.mrb[0].mxu0
  %v677 = vadd.f32 0.0, %v676
  %v678 = vpop.f32.mrb[0].mxu0
  %v679 = vadd.f32 0.0, %v678
  %680 = vdwg.mxu0
  %v681 = vld [vmem:[%s8] sm:$0xff]
  %v682 = vld [vmem:[%s8 + $0x8] sm:$0xff]
  %v683 = vld [vmem:[%s8 + $0x10] sm:$0xff]
  %v684 = vld [vmem:[%s8 + $0x18] sm:$0xff]
  %v685 = vld [vmem:[%s9] sm:$0xff]
  %v686 = vld [vmem:[%s9 + $0x8] sm:$0xff]
  %v687 = vld [vmem:[%s9 + $0x10] sm:$0xff]
  %v688 = vld [vmem:[%s9 + $0x18] sm:$0xff]
  %v689 = vadd.f32 %v610, %v612
  %v690 = vadd.f32 %v689, %v663
  %v691 = vadd.f32 %v690, %v665
  %692 = vadd.xlane.f32.xlu0 %v691
  %v693 = vpop.xlane.xlu0 %692
  %v694 = vadd.f32 %v614, %v616
  %v695 = vadd.f32 %v694, %v667
  %v696 = vadd.f32 %v695, %v669
  %697 = vadd.xlane.f32.xlu0 %v696
  %v698 = vpop.xlane.xlu0 %697
  %v699 = vadd.f32 %v620, %v622
  %v700 = vadd.f32 %v699, %v673
  %v701 = vadd.f32 %v700, %v675
  %702 = vadd.xlane.f32.xlu0 %v701
  %v703 = vpop.xlane.xlu0 %702
  %v704 = vadd.f32 %v624, %v626
  %v705 = vadd.f32 %v704, %v677
  %v706 = vadd.f32 %v705, %v679
  %707 = vadd.xlane.f32.xlu0 %v706
  %v708 = vpop.xlane.xlu0 %707
  %v709 = vmul.f32 %v610, %v610
  %v710 = vmul.f32 %v612, %v612
  %v711 = vmul.f32 %v663, %v663
  %v712 = vmul.f32 %v665, %v665
  %v713 = vmul.f32 %v614, %v614
  %v714 = vmul.f32 %v616, %v616
  %v715 = vmul.f32 %v667, %v667
  %v716 = vmul.f32 %v669, %v669
  %v717 = vmul.f32 %v620, %v620
  %v718 = vmul.f32 %v622, %v622
  %v719 = vmul.f32 %v673, %v673
  %v720 = vmul.f32 %v675, %v675
  %v721 = vmul.f32 %v624, %v624
  %v722 = vmul.f32 %v626, %v626
  %v723 = vmul.f32 %v677, %v677
  %v724 = vmul.f32 %v679, %v679
  %v725 = vadd.f32 %v709, %v710
  %v726 = vadd.f32 %v725, %v711
  %v727 = vadd.f32 %v726, %v712
  %728 = vadd.xlane.f32.xlu0 %v727
  %v729 = vpop.xlane.xlu0 %728
  %v730 = vadd.f32 %v713, %v714
  %v731 = vadd.f32 %v730, %v715
  %v732 = vadd.f32 %v731, %v716
  %733 = vadd.xlane.f32.xlu0 %v732
  %v734 = vpop.xlane.xlu0 %733
  %v735 = vadd.f32 %v717, %v718
  %v736 = vadd.f32 %v735, %v719
  %v737 = vadd.f32 %v736, %v720
  %738 = vadd.xlane.f32.xlu0 %v737
  %v739 = vpop.xlane.xlu0 %738
  %v740 = vadd.f32 %v721, %v722
  %v741 = vadd.f32 %v740, %v723
  %v742 = vadd.f32 %v741, %v724
  %743 = vadd.xlane.f32.xlu0 %v742
  %v744 = vpop.xlane.xlu0 %743
  %v745 = vmul.f32 %v693, 0.001953125
  %v746 = vmul.f32 %v698, 0.001953125
  %v747 = vmul.f32 %v703, 0.001953125
  %v748 = vmul.f32 %v708, 0.001953125
  %v749 = vmul.f32 %v729, 0.001953125
  %v750 = vmul.f32 %v734, 0.001953125
  %v751 = vmul.f32 %v739, 0.001953125
  %v752 = vmul.f32 %v744, 0.001953125
  %v753 = vmul.f32 %v745, %v745
  %v754 = vmul.f32 %v746, %v746
  %v755 = vmul.f32 %v747, %v747
  %v756 = vmul.f32 %v748, %v748
  %v757 = vsub.f32 %v749, %v753
  %v758 = vsub.f32 %v750, %v754
  %v759 = vsub.f32 %v751, %v755
  %v760 = vsub.f32 %v752, %v756
  %v761 = vadd.f32 %v757, 1e-05
  %v762 = vadd.f32 %v758, 1e-05
  %v763 = vadd.f32 %v759, 1e-05
  %v764 = vadd.f32 %v760, 1e-05
  %v765 = vrsqrt.pop %v761
  %v766 = vrsqrt.pop %v762
  %v767 = vrsqrt.pop %v763
  %v768 = vrsqrt.pop %v764
  %v769 = vmul.f32 %v681, %v765
  %v770 = vmul.f32 %v682, %v766
  %v771 = vmul.f32 %v683, %v767
  %v772 = vmul.f32 %v684, %v768
  %v773 = vsub.f32 %v610, %v745
  %v774 = vsub.f32 %v612, %v745
  %v775 = vsub.f32 %v663, %v745
  %v776 = vsub.f32 %v665, %v745
  %v777 = vsub.f32 %v614, %v746
  %v778 = vsub.f32 %v616, %v746
  %v779 = vsub.f32 %v667, %v746
  %v780 = vsub.f32 %v669, %v746
  %v781 = vsub.f32 %v620, %v747
  %v782 = vsub.f32 %v622, %v747
  %v783 = vsub.f32 %v673, %v747
  %v784 = vsub.f32 %v675, %v747
  %v785 = vsub.f32 %v624, %v748
  %v786 = vsub.f32 %v626, %v748
  %v787 = vsub.f32 %v677, %v748
  %v788 = vsub.f32 %v679, %v748
  %790 = vset.pattern.permute.xlu0 0
  %791 = vperm.xlu0 %790, %v769
  %v792 = vpop.permute.xlu0 %791
  %795 = vset.pattern.permute.xlu0 0
  %796 = vperm.xlu0 %795, %v770
  %v797 = vpop.permute.xlu0 %796
  %800 = vset.pattern.permute.xlu0 0
  %801 = vperm.xlu0 %800, %v771
  %v802 = vpop.permute.xlu0 %801
  %805 = vset.pattern.permute.xlu0 0
  %806 = vperm.xlu0 %805, %v772
  %v807 = vpop.permute.xlu0 %806
  %v809 = vmul.f32 %v773, %v792
  %v810 = vmul.f32 %v774, %v792
  %v811 = vmul.f32 %v775, %v792
  %v812 = vmul.f32 %v776, %v792
  %v813 = vmul.f32 %v777, %v797
  %v814 = vmul.f32 %v778, %v797
  %v815 = vmul.f32 %v779, %v797
  %v816 = vmul.f32 %v780, %v797
  %v817 = vmul.f32 %v781, %v802
  %v818 = vmul.f32 %v782, %v802
  %v819 = vmul.f32 %v783, %v802
  %v820 = vmul.f32 %v784, %v802
  %v821 = vmul.f32 %v785, %v807
  %v822 = vmul.f32 %v786, %v807
  %v823 = vmul.f32 %v787, %v807
  %v824 = vmul.f32 %v788, %v807
  %826 = vset.pattern.permute.xlu0 0
  %827 = vperm.xlu0 %826, %v685
  %v828 = vpop.permute.xlu0 %827
  %831 = vset.pattern.permute.xlu0 0
  %832 = vperm.xlu0 %831, %v686
  %v833 = vpop.permute.xlu0 %832
  %836 = vset.pattern.permute.xlu0 0
  %837 = vperm.xlu0 %836, %v687
  %v838 = vpop.permute.xlu0 %837
  %841 = vset.pattern.permute.xlu0 0
  %842 = vperm.xlu0 %841, %v688
  %v843 = vpop.permute.xlu0 %842
  %v845 = vadd.f32 %v809, %v828
  %v846 = vadd.f32 %v810, %v828
  %v847 = vadd.f32 %v811, %v828
  %v848 = vadd.f32 %v812, %v828
  %v849 = vadd.f32 %v813, %v833
  %v850 = vadd.f32 %v814, %v833
  %v851 = vadd.f32 %v815, %v833
  %v852 = vadd.f32 %v816, %v833
  %v853 = vadd.f32 %v817, %v838
  %v854 = vadd.f32 %v818, %v838
  %v855 = vadd.f32 %v819, %v838
  %v856 = vadd.f32 %v820, %v838
  %v857 = vadd.f32 %v821, %v843
  %v858 = vadd.f32 %v822, %v843
  %v859 = vadd.f32 %v823, %v843
  %v860 = vadd.f32 %v824, %v843
  %v861 = vmax.f32 %v845, 0.0
  %v862 = vmax.f32 %v846, 0.0
  %v863 = vmax.f32 %v847, 0.0
  %v864 = vmax.f32 %v848, 0.0
  %v865 = vmax.f32 %v849, 0.0
  %v866 = vmax.f32 %v850, 0.0
  %v867 = vmax.f32 %v851, 0.0
  %v868 = vmax.f32 %v852, 0.0
  %v869 = vmax.f32 %v853, 0.0
  %v870 = vmax.f32 %v854, 0.0
  %v871 = vmax.f32 %v855, 0.0
  %v872 = vmax.f32 %v856, 0.0
  %v873 = vmax.f32 %v857, 0.0
  %v874 = vmax.f32 %v858, 0.0
  %v875 = vmax.f32 %v859, 0.0
  %v876 = vmax.f32 %v860, 0.0
  %v877 = vld [vmem:[%s10] sm:$0xf]
  %v878 = vld [vmem:[%s10 + $0x4] sm:$0xf]
  %v879 = vld [vmem:[%s10 + $0x8] sm:$0xf]
  %v880 = vld [vmem:[%s10 + $0xc] sm:$0xf]
  %v881 = vpack.c.bf16 %v865, %v861
  %v882 = vpack.c.bf16 %v866, %v862
  %v883 = vpack.c.bf16 %v867, %v863
  %v884 = vpack.c.bf16 %v868, %v864
  %v885 = vpack.c.bf16 %v873, %v869
  %v886 = vpack.c.bf16 %v874, %v870
  %v887 = vpack.c.bf16 %v875, %v871
  %v888 = vpack.c.bf16 %v876, %v872
  %v889 = vld [vmem:[%s11] sm:$0xff]
  %v890 = vld [vmem:[%s11 + $0x8] sm:$0xff]
  %v891 = vld [vmem:[%s11 + $0x10] sm:$0xff]
  %v892 = vld [vmem:[%s11 + $0x18] sm:$0xff]
  %894 = vset.pattern.permute.xlu0 0
  %895 = vperm.xlu0 %894, %v889
  %v896 = vpop.permute.xlu0 %895
  %899 = vset.pattern.permute.xlu0 0
  %900 = vperm.xlu0 %899, %v890
  %v901 = vpop.permute.xlu0 %900
  %904 = vset.pattern.permute.xlu0 0
  %905 = vperm.xlu0 %904, %v891
  %v906 = vpop.permute.xlu0 %905
  %909 = vset.pattern.permute.xlu0 0
  %910 = vperm.xlu0 %909, %v892
  %v911 = vpop.permute.xlu0 %910
  %v917 = vunpack.c.l.b16 %v877
  %v918 = vunpack.c.l.b16 %v878
  %v919 = vunpack.c.l.b16 %v879
  %v920 = vunpack.c.l.b16 %v880
  %v921 = vpack.c.b16 %v918, %v917
  %v922 = vpack.c.b16 %v920, %v919
  %v924 = vsel %vm568, %v921, 0
  %v927 = vsel %vm568, %v922, 0
  %929 = vmatprep.subr.bf16.mxu0 %v882
  %930 = vmatpush1.bf16.msra.mxu0 %v881
  %931 = vmatprep.subr.bf16.mxu0 %v886
  %932 = vmatpush1.bf16.msra.mxu0 %v885
  %933 = vmatprep.subr.bf16.mxu0 0
  %934 = vmatpush1.bf16.msra.mxu0 0
  %935 = vmatprep.subr.bf16.mxu0 0
  %936 = vmatpush1.bf16.msra.mxu0 0
  %937 = vmatprep.subr.bf16.mxu0 0
  %938 = vmatpush1.bf16.msra.mxu0 0
  %939 = vmatprep.subr.bf16.mxu0 0
  %940 = vmatpush1.bf16.msra.mxu0 0
  %941 = vmatprep.subr.bf16.mxu0 0
  %942 = vmatpush1.bf16.msra.mxu0 0
  %943 = vmatprep.subr.bf16.mxu0 0
  %944 = vmatpush1.bf16.msra.mxu0 0
  %945 = vmatprep.subr.bf16.mxu0 0
  %946 = vmatpush1.bf16.msra.mxu0 0
  %947 = vmatprep.subr.bf16.mxu0 0
  %948 = vmatpush1.bf16.msra.mxu0 0
  %949 = vmatprep.subr.bf16.mxu0 0
  %950 = vmatpush1.bf16.msra.mxu0 0
  %951 = vmatprep.subr.bf16.mxu0 0
  %952 = vmatpush1.bf16.msra.mxu0 0
  %953 = vmatprep.subr.bf16.mxu0 0
  %954 = vmatpush1.bf16.msra.mxu0 0
  %955 = vmatprep.subr.bf16.mxu0 0
  %956 = vmatpush1.bf16.msra.mxu0 0
  %957 = vmatprep.subr.bf16.mxu0 0
  %958 = vmatpush1.bf16.msra.mxu0 0
  %959 = vmatprep.subr.bf16.mxu0 0
  %960 = vmatpush1.bf16.msra.mxu0 0
  %961 = vmatprep.mubr.bf16.mxu0 0
  %962 = vmatmul.mubr.bf16.gmra.mrb[0].mxu0 %v924
  %v963 = vpop.f32.mrb[0].mxu0
  %v964 = vadd.f32 %v896, %v963
  %v965 = vpop.f32.mrb[0].mxu0
  %v966 = vadd.f32 %v896, %v965
  %v967 = vpop.f32.mrb[0].mxu0
  %v968 = vadd.f32 %v901, %v967
  %v969 = vpop.f32.mrb[0].mxu0
  %v970 = vadd.f32 %v901, %v969
  %971 = vmatprep.mubr.bf16.mxu0 0
  %972 = vmatmul.mubr.bf16.gmra.mrb[0].mxu0 %v927
  %v973 = vpop.f32.mrb[0].mxu0
  %v974 = vadd.f32 %v906, %v973
  %v975 = vpop.f32.mrb[0].mxu0
  %v976 = vadd.f32 %v906, %v975
  %v977 = vpop.f32.mrb[0].mxu0
  %v978 = vadd.f32 %v911, %v977
  %v979 = vpop.f32.mrb[0].mxu0
  %v980 = vadd.f32 %v911, %v979
  %981 = vdwg.mxu0
  %982 = vmatprep.subr.bf16.mxu0 %v884
  %983 = vmatpush1.bf16.msra.mxu0 %v883
  %984 = vmatprep.subr.bf16.mxu0 %v888
  %985 = vmatpush1.bf16.msra.mxu0 %v887
  %986 = vmatprep.subr.bf16.mxu0 0
  %987 = vmatpush1.bf16.msra.mxu0 0
  %988 = vmatprep.subr.bf16.mxu0 0
  %989 = vmatpush1.bf16.msra.mxu0 0
  %990 = vmatprep.subr.bf16.mxu0 0
  %991 = vmatpush1.bf16.msra.mxu0 0
  %992 = vmatprep.subr.bf16.mxu0 0
  %993 = vmatpush1.bf16.msra.mxu0 0
  %994 = vmatprep.subr.bf16.mxu0 0
  %995 = vmatpush1.bf16.msra.mxu0 0
  %996 = vmatprep.subr.bf16.mxu0 0
  %997 = vmatpush1.bf16.msra.mxu0 0
  %998 = vmatprep.subr.bf16.mxu0 0
  %999 = vmatpush1.bf16.msra.mxu0 0
  %1000 = vmatprep.subr.bf16.mxu0 0
  %1001 = vmatpush1.bf16.msra.mxu0 0
  %1002 = vmatprep.subr.bf16.mxu0 0
  %1003 = vmatpush1.bf16.msra.mxu0 0
  %1004 = vmatprep.subr.bf16.mxu0 0
  %1005 = vmatpush1.bf16.msra.mxu0 0
  %1006 = vmatprep.subr.bf16.mxu0 0
  %1007 = vmatpush1.bf16.msra.mxu0 0
  %1008 = vmatprep.subr.bf16.mxu0 0
  %1009 = vmatpush1.bf16.msra.mxu0 0
  %1010 = vmatprep.subr.bf16.mxu0 0
  %1011 = vmatpush1.bf16.msra.mxu0 0
  %1012 = vmatprep.subr.bf16.mxu0 0
  %1013 = vmatpush1.bf16.msra.mxu0 0
  %1014 = vmatprep.mubr.bf16.mxu0 0
  %1015 = vmatmul.mubr.bf16.gmra.mrb[0].mxu0 %v924
  %v1016 = vpop.f32.mrb[0].mxu0
  %v1017 = vadd.f32 %v896, %v1016
  %v1018 = vpop.f32.mrb[0].mxu0
  %v1019 = vadd.f32 %v896, %v1018
  %v1020 = vpop.f32.mrb[0].mxu0
  %v1021 = vadd.f32 %v901, %v1020
  %v1022 = vpop.f32.mrb[0].mxu0
  %v1023 = vadd.f32 %v901, %v1022
  %1024 = vmatprep.mubr.bf16.mxu0 0
  %1025 = vmatmul.mubr.bf16.gmra.mrb[0].mxu0 %v927
  %v1026 = vpop.f32.mrb[0].mxu0
  %v1027 = vadd.f32 %v906, %v1026
  %v1028 = vpop.f32.mrb[0].mxu0
  %v1029 = vadd.f32 %v906, %v1028
  %v1030 = vpop.f32.mrb[0].mxu0
  %v1031 = vadd.f32 %v911, %v1030
  %v1032 = vpop.f32.mrb[0].mxu0
  %v1033 = vadd.f32 %v911, %v1032
  %1034 = vdwg.mxu0
  %v1035 = vadd.f32 %v530, %v964
  %v1036 = vadd.f32 %v531, %v966
  %v1037 = vadd.f32 %v532, %v1017
  %v1038 = vadd.f32 %v533, %v1019
  %v1039 = vadd.f32 %v534, %v968
  %v1040 = vadd.f32 %v535, %v970
  %v1041 = vadd.f32 %v536, %v1021
  %v1042 = vadd.f32 %v537, %v1023
  %v1043 = vadd.f32 %v538, %v974
  %v1044 = vadd.f32 %v539, %v976
  %v1045 = vadd.f32 %v540, %v1027
  %v1046 = vadd.f32 %v541, %v1029
  %v1047 = vadd.f32 %v542, %v978
  %v1048 = vadd.f32 %v543, %v980
  %v1049 = vadd.f32 %v544, %v1031
  %v1050 = vadd.f32 %v545, %v1033
  %s1051 = scalar_lea.vmem %s7, 16
  %v1052 = vld [vmem:[%s1051] sm:$0xf]
  %v1053 = vld [vmem:[%s1051 + $0x4] sm:$0xf]
  %v1054 = vld [vmem:[%s1051 + $0x8] sm:$0xf]
  %v1055 = vld [vmem:[%s1051 + $0xc] sm:$0xf]
  %v1056 = vpack.c.bf16 %v1039, %v1035
  %v1057 = vpack.c.bf16 %v1040, %v1036
  %v1058 = vpack.c.bf16 %v1041, %v1037
  %v1059 = vpack.c.bf16 %v1042, %v1038
  %v1060 = vpack.c.bf16 %v1047, %v1043
  %v1061 = vpack.c.bf16 %v1048, %v1044
  %v1062 = vpack.c.bf16 %v1049, %v1045
  %v1063 = vpack.c.bf16 %v1050, %v1046
  %v1068 = vunpack.c.l.b16 %v1052
  %v1069 = vunpack.c.l.b16 %v1053
  %v1070 = vunpack.c.l.b16 %v1054
  %v1071 = vunpack.c.l.b16 %v1055
  %v1072 = vpack.c.b16 %v1069, %v1068
  %v1073 = vpack.c.b16 %v1071, %v1070
  %v1075 = vsel %vm568, %v1072, 0
  %v1078 = vsel %vm568, %v1073, 0
  %1080 = vmatprep.subr.bf16.mxu0 %v1057
  %1081 = vmatpush1.bf16.msra.mxu0 %v1056
  %1082 = vmatprep.subr.bf16.mxu0 %v1061
  %1083 = vmatpush1.bf16.msra.mxu0 %v1060
  %1084 = vmatprep.subr.bf16.mxu0 0
  %1085 = vmatpush1.bf16.msra.mxu0 0
  %1086 = vmatprep.subr.bf16.mxu0 0
  %1087 = vmatpush1.bf16.msra.mxu0 0
  %1088 = vmatprep.subr.bf16.mxu0 0
  %1089 = vmatpush1.bf16.msra.mxu0 0
  %1090 = vmatprep.subr.bf16.mxu0 0
  %1091 = vmatpush1.bf16.msra.mxu0 0
  %1092 = vmatprep.subr.bf16.mxu0 0
  %1093 = vmatpush1.bf16.msra.mxu0 0
  %1094 = vmatprep.subr.bf16.mxu0 0
  %1095 = vmatpush1.bf16.msra.mxu0 0
  %1096 = vmatprep.subr.bf16.mxu0 0
  %1097 = vmatpush1.bf16.msra.mxu0 0
  %1098 = vmatprep.subr.bf16.mxu0 0
  %1099 = vmatpush1.bf16.msra.mxu0 0
  %1100 = vmatprep.subr.bf16.mxu0 0
  %1101 = vmatpush1.bf16.msra.mxu0 0
  %1102 = vmatprep.subr.bf16.mxu0 0
  %1103 = vmatpush1.bf16.msra.mxu0 0
  %1104 = vmatprep.subr.bf16.mxu0 0
  %1105 = vmatpush1.bf16.msra.mxu0 0
  %1106 = vmatprep.subr.bf16.mxu0 0
  %1107 = vmatpush1.bf16.msra.mxu0 0
  %1108 = vmatprep.subr.bf16.mxu0 0
  %1109 = vmatpush1.bf16.msra.mxu0 0
  %1110 = vmatprep.subr.bf16.mxu0 0
  %1111 = vmatpush1.bf16.msra.mxu0 0
  %1112 = vmatprep.mubr.bf16.mxu0 0
  %1113 = vmatmul.mubr.bf16.gmra.mrb[0].mxu0 %v1075
  %v1114 = vpop.f32.mrb[0].mxu0
  %v1115 = vadd.f32 0.0, %v1114
  %v1116 = vpop.f32.mrb[0].mxu0
  %v1117 = vadd.f32 0.0, %v1116
  %v1118 = vpop.f32.mrb[0].mxu0
  %v1119 = vadd.f32 0.0, %v1118
  %v1120 = vpop.f32.mrb[0].mxu0
  %v1121 = vadd.f32 0.0, %v1120
  %1122 = vmatprep.mubr.bf16.mxu0 0
  %1123 = vmatmul.mubr.bf16.gmra.mrb[0].mxu0 %v1078
  %v1124 = vpop.f32.mrb[0].mxu0
  %v1125 = vadd.f32 0.0, %v1124
  %v1126 = vpop.f32.mrb[0].mxu0
  %v1127 = vadd.f32 0.0, %v1126
  %v1128 = vpop.f32.mrb[0].mxu0
  %v1129 = vadd.f32 0.0, %v1128
  %v1130 = vpop.f32.mrb[0].mxu0
  %v1131 = vadd.f32 0.0, %v1130
  %1132 = vdwg.mxu0
  %1133 = vmatprep.subr.bf16.mxu0 %v1059
  %1134 = vmatpush1.bf16.msra.mxu0 %v1058
  %1135 = vmatprep.subr.bf16.mxu0 %v1063
  %1136 = vmatpush1.bf16.msra.mxu0 %v1062
  %1137 = vmatprep.subr.bf16.mxu0 0
  %1138 = vmatpush1.bf16.msra.mxu0 0
  %1139 = vmatprep.subr.bf16.mxu0 0
  %1140 = vmatpush1.bf16.msra.mxu0 0
  %1141 = vmatprep.subr.bf16.mxu0 0
  %1142 = vmatpush1.bf16.msra.mxu0 0
  %1143 = vmatprep.subr.bf16.mxu0 0
  %1144 = vmatpush1.bf16.msra.mxu0 0
  %1145 = vmatprep.subr.bf16.mxu0 0
  %1146 = vmatpush1.bf16.msra.mxu0 0
  %1147 = vmatprep.subr.bf16.mxu0 0
  %1148 = vmatpush1.bf16.msra.mxu0 0
  %1149 = vmatprep.subr.bf16.mxu0 0
  %1150 = vmatpush1.bf16.msra.mxu0 0
  %1151 = vmatprep.subr.bf16.mxu0 0
  %1152 = vmatpush1.bf16.msra.mxu0 0
  %1153 = vmatprep.subr.bf16.mxu0 0
  %1154 = vmatpush1.bf16.msra.mxu0 0
  %1155 = vmatprep.subr.bf16.mxu0 0
  %1156 = vmatpush1.bf16.msra.mxu0 0
  %1157 = vmatprep.subr.bf16.mxu0 0
  %1158 = vmatpush1.bf16.msra.mxu0 0
  %1159 = vmatprep.subr.bf16.mxu0 0
  %1160 = vmatpush1.bf16.msra.mxu0 0
  %1161 = vmatprep.subr.bf16.mxu0 0
  %1162 = vmatpush1.bf16.msra.mxu0 0
  %1163 = vmatprep.subr.bf16.mxu0 0
  %1164 = vmatpush1.bf16.msra.mxu0 0
  %1165 = vmatprep.mubr.bf16.mxu0 0
  %1166 = vmatmul.mubr.bf16.gmra.mrb[0].mxu0 %v1075
  %v1167 = vpop.f32.mrb[0].mxu0
  %v1168 = vadd.f32 0.0, %v1167
  %v1169 = vpop.f32.mrb[0].mxu0
  %v1170 = vadd.f32 0.0, %v1169
  %v1171 = vpop.f32.mrb[0].mxu0
  %v1172 = vadd.f32 0.0, %v1171
  %v1173 = vpop.f32.mrb[0].mxu0
  %v1174 = vadd.f32 0.0, %v1173
  %1175 = vmatprep.mubr.bf16.mxu0 0
  %1176 = vmatmul.mubr.bf16.gmra.mrb[0].mxu0 %v1078
  %v1177 = vpop.f32.mrb[0].mxu0
  %v1178 = vadd.f32 0.0, %v1177
  %v1179 = vpop.f32.mrb[0].mxu0
  %v1180 = vadd.f32 0.0, %v1179
  %v1181 = vpop.f32.mrb[0].mxu0
  %v1182 = vadd.f32 0.0, %v1181
  %v1183 = vpop.f32.mrb[0].mxu0
  %v1184 = vadd.f32 0.0, %v1183
  %1185 = vdwg.mxu0
  %s1186 = scalar_lea.vmem %s8, 32
  %v1187 = vld [vmem:[%s1186] sm:$0xff]
  %v1188 = vld [vmem:[%s1186 + $0x8] sm:$0xff]
  %v1189 = vld [vmem:[%s1186 + $0x10] sm:$0xff]
  %v1190 = vld [vmem:[%s1186 + $0x18] sm:$0xff]
  %s1191 = scalar_lea.vmem %s9, 32
  %v1192 = vld [vmem:[%s1191] sm:$0xff]
  %v1193 = vld [vmem:[%s1191 + $0x8] sm:$0xff]
  %v1194 = vld [vmem:[%s1191 + $0x10] sm:$0xff]
  %v1195 = vld [vmem:[%s1191 + $0x18] sm:$0xff]
  %v1196 = vadd.f32 %v1115, %v1117
  %v1197 = vadd.f32 %v1196, %v1168
  %v1198 = vadd.f32 %v1197, %v1170
  %1199 = vadd.xlane.f32.xlu0 %v1198
  %v1200 = vpop.xlane.xlu0 %1199
  %v1201 = vadd.f32 %v1119, %v1121
  %v1202 = vadd.f32 %v1201, %v1172
  %v1203 = vadd.f32 %v1202, %v1174
  %1204 = vadd.xlane.f32.xlu0 %v1203
  %v1205 = vpop.xlane.xlu0 %1204
  %v1206 = vadd.f32 %v1125, %v1127
  %v1207 = vadd.f32 %v1206, %v1178
  %v1208 = vadd.f32 %v1207, %v1180
  %1209 = vadd.xlane.f32.xlu0 %v1208
  %v1210 = vpop.xlane.xlu0 %1209
  %v1211 = vadd.f32 %v1129, %v1131
  %v1212 = vadd.f32 %v1211, %v1182
  %v1213 = vadd.f32 %v1212, %v1184
  %1214 = vadd.xlane.f32.xlu0 %v1213
  %v1215 = vpop.xlane.xlu0 %1214
  %v1216 = vmul.f32 %v1115, %v1115
  %v1217 = vmul.f32 %v1117, %v1117
  %v1218 = vmul.f32 %v1168, %v1168
  %v1219 = vmul.f32 %v1170, %v1170
  %v1220 = vmul.f32 %v1119, %v1119
  %v1221 = vmul.f32 %v1121, %v1121
  %v1222 = vmul.f32 %v1172, %v1172
  %v1223 = vmul.f32 %v1174, %v1174
  %v1224 = vmul.f32 %v1125, %v1125
  %v1225 = vmul.f32 %v1127, %v1127
  %v1226 = vmul.f32 %v1178, %v1178
  %v1227 = vmul.f32 %v1180, %v1180
  %v1228 = vmul.f32 %v1129, %v1129
  %v1229 = vmul.f32 %v1131, %v1131
  %v1230 = vmul.f32 %v1182, %v1182
  %v1231 = vmul.f32 %v1184, %v1184
  %v1232 = vadd.f32 %v1216, %v1217
  %v1233 = vadd.f32 %v1232, %v1218
  %v1234 = vadd.f32 %v1233, %v1219
  %1235 = vadd.xlane.f32.xlu0 %v1234
  %v1236 = vpop.xlane.xlu0 %1235
  %v1237 = vadd.f32 %v1220, %v1221
  %v1238 = vadd.f32 %v1237, %v1222
  %v1239 = vadd.f32 %v1238, %v1223
  %1240 = vadd.xlane.f32.xlu0 %v1239
  %v1241 = vpop.xlane.xlu0 %1240
  %v1242 = vadd.f32 %v1224, %v1225
  %v1243 = vadd.f32 %v1242, %v1226
  %v1244 = vadd.f32 %v1243, %v1227
  %1245 = vadd.xlane.f32.xlu0 %v1244
  %v1246 = vpop.xlane.xlu0 %1245
  %v1247 = vadd.f32 %v1228, %v1229
  %v1248 = vadd.f32 %v1247, %v1230
  %v1249 = vadd.f32 %v1248, %v1231
  %1250 = vadd.xlane.f32.xlu0 %v1249
  %v1251 = vpop.xlane.xlu0 %1250
  %v1252 = vmul.f32 %v1200, 0.001953125
  %v1253 = vmul.f32 %v1205, 0.001953125
  %v1254 = vmul.f32 %v1210, 0.001953125
  %v1255 = vmul.f32 %v1215, 0.001953125
  %v1256 = vmul.f32 %v1236, 0.001953125
  %v1257 = vmul.f32 %v1241, 0.001953125
  %v1258 = vmul.f32 %v1246, 0.001953125
  %v1259 = vmul.f32 %v1251, 0.001953125
  %v1260 = vmul.f32 %v1252, %v1252
  %v1261 = vmul.f32 %v1253, %v1253
  %v1262 = vmul.f32 %v1254, %v1254
  %v1263 = vmul.f32 %v1255, %v1255
  %v1264 = vsub.f32 %v1256, %v1260
  %v1265 = vsub.f32 %v1257, %v1261
  %v1266 = vsub.f32 %v1258, %v1262
  %v1267 = vsub.f32 %v1259, %v1263
  %v1268 = vadd.f32 %v1264, 1e-05
  %v1269 = vadd.f32 %v1265, 1e-05
  %v1270 = vadd.f32 %v1266, 1e-05
  %v1271 = vadd.f32 %v1267, 1e-05
  %v1272 = vrsqrt.pop %v1268
  %v1273 = vrsqrt.pop %v1269
  %v1274 = vrsqrt.pop %v1270
  %v1275 = vrsqrt.pop %v1271
  %v1276 = vmul.f32 %v1187, %v1272
  %v1277 = vmul.f32 %v1188, %v1273
  %v1278 = vmul.f32 %v1189, %v1274
  %v1279 = vmul.f32 %v1190, %v1275
  %v1280 = vsub.f32 %v1115, %v1252
  %v1281 = vsub.f32 %v1117, %v1252
  %v1282 = vsub.f32 %v1168, %v1252
  %v1283 = vsub.f32 %v1170, %v1252
  %v1284 = vsub.f32 %v1119, %v1253
  %v1285 = vsub.f32 %v1121, %v1253
  %v1286 = vsub.f32 %v1172, %v1253
  %v1287 = vsub.f32 %v1174, %v1253
  %v1288 = vsub.f32 %v1125, %v1254
  %v1289 = vsub.f32 %v1127, %v1254
  %v1290 = vsub.f32 %v1178, %v1254
  %v1291 = vsub.f32 %v1180, %v1254
  %v1292 = vsub.f32 %v1129, %v1255
  %v1293 = vsub.f32 %v1131, %v1255
  %v1294 = vsub.f32 %v1182, %v1255
  %v1295 = vsub.f32 %v1184, %v1255
  %1297 = vset.pattern.permute.xlu0 0
  %1298 = vperm.xlu0 %1297, %v1276
  %v1299 = vpop.permute.xlu0 %1298
  %1302 = vset.pattern.permute.xlu0 0
  %1303 = vperm.xlu0 %1302, %v1277
  %v1304 = vpop.permute.xlu0 %1303
  %1307 = vset.pattern.permute.xlu0 0
  %1308 = vperm.xlu0 %1307, %v1278
  %v1309 = vpop.permute.xlu0 %1308
  %1312 = vset.pattern.permute.xlu0 0
  %1313 = vperm.xlu0 %1312, %v1279
  %v1314 = vpop.permute.xlu0 %1313
  %v1316 = vmul.f32 %v1280, %v1299
  %v1317 = vmul.f32 %v1281, %v1299
  %v1318 = vmul.f32 %v1282, %v1299
  %v1319 = vmul.f32 %v1283, %v1299
  %v1320 = vmul.f32 %v1284, %v1304
  %v1321 = vmul.f32 %v1285, %v1304
  %v1322 = vmul.f32 %v1286, %v1304
  %v1323 = vmul.f32 %v1287, %v1304
  %v1324 = vmul.f32 %v1288, %v1309
  %v1325 = vmul.f32 %v1289, %v1309
  %v1326 = vmul.f32 %v1290, %v1309
  %v1327 = vmul.f32 %v1291, %v1309
  %v1328 = vmul.f32 %v1292, %v1314
  %v1329 = vmul.f32 %v1293, %v1314
  %v1330 = vmul.f32 %v1294, %v1314
  %v1331 = vmul.f32 %v1295, %v1314
  %1333 = vset.pattern.permute.xlu0 0
  %1334 = vperm.xlu0 %1333, %v1192
  %v1335 = vpop.permute.xlu0 %1334
  %1338 = vset.pattern.permute.xlu0 0
  %1339 = vperm.xlu0 %1338, %v1193
  %v1340 = vpop.permute.xlu0 %1339
  %1343 = vset.pattern.permute.xlu0 0
  %1344 = vperm.xlu0 %1343, %v1194
  %v1345 = vpop.permute.xlu0 %1344
  %1348 = vset.pattern.permute.xlu0 0
  %1349 = vperm.xlu0 %1348, %v1195
  %v1350 = vpop.permute.xlu0 %1349
  %v1352 = vadd.f32 %v1316, %v1335
  %v1353 = vadd.f32 %v1317, %v1335
  %v1354 = vadd.f32 %v1318, %v1335
  %v1355 = vadd.f32 %v1319, %v1335
  %v1356 = vadd.f32 %v1320, %v1340
  %v1357 = vadd.f32 %v1321, %v1340
  %v1358 = vadd.f32 %v1322, %v1340
  %v1359 = vadd.f32 %v1323, %v1340
  %v1360 = vadd.f32 %v1324, %v1345
  %v1361 = vadd.f32 %v1325, %v1345
  %v1362 = vadd.f32 %v1326, %v1345
  %v1363 = vadd.f32 %v1327, %v1345
  %v1364 = vadd.f32 %v1328, %v1350
  %v1365 = vadd.f32 %v1329, %v1350
  %v1366 = vadd.f32 %v1330, %v1350
  %v1367 = vadd.f32 %v1331, %v1350
  %v1368 = vmax.f32 %v1352, 0.0
  %v1369 = vmax.f32 %v1353, 0.0
  %v1370 = vmax.f32 %v1354, 0.0
  %v1371 = vmax.f32 %v1355, 0.0
  %v1372 = vmax.f32 %v1356, 0.0
  %v1373 = vmax.f32 %v1357, 0.0
  %v1374 = vmax.f32 %v1358, 0.0
  %v1375 = vmax.f32 %v1359, 0.0
  %v1376 = vmax.f32 %v1360, 0.0
  %v1377 = vmax.f32 %v1361, 0.0
  %v1378 = vmax.f32 %v1362, 0.0
  %v1379 = vmax.f32 %v1363, 0.0
  %v1380 = vmax.f32 %v1364, 0.0
  %v1381 = vmax.f32 %v1365, 0.0
  %v1382 = vmax.f32 %v1366, 0.0
  %v1383 = vmax.f32 %v1367, 0.0
  %s1384 = scalar_lea.vmem %s10, 16
  %v1385 = vld [vmem:[%s1384] sm:$0xf]
  %v1386 = vld [vmem:[%s1384 + $0x4] sm:$0xf]
  %v1387 = vld [vmem:[%s1384 + $0x8] sm:$0xf]
  %v1388 = vld [vmem:[%s1384 + $0xc] sm:$0xf]
  %v1389 = vpack.c.bf16 %v1372, %v1368
  %v1390 = vpack.c.bf16 %v1373, %v1369
  %v1391 = vpack.c.bf16 %v1374, %v1370
  %v1392 = vpack.c.bf16 %v1375, %v1371
  %v1393 = vpack.c.bf16 %v1380, %v1376
  %v1394 = vpack.c.bf16 %v1381, %v1377
  %v1395 = vpack.c.bf16 %v1382, %v1378
  %v1396 = vpack.c.bf16 %v1383, %v1379
  %s1397 = scalar_lea.vmem %s11, 32
  %v1398 = vld [vmem:[%s1397] sm:$0xff]
  %v1399 = vld [vmem:[%s1397 + $0x8] sm:$0xff]
  %v1400 = vld [vmem:[%s1397 + $0x10] sm:$0xff]
  %v1401 = vld [vmem:[%s1397 + $0x18] sm:$0xff]
  %1403 = vset.pattern.permute.xlu0 0
  %1404 = vperm.xlu0 %1403, %v1398
  %v1405 = vpop.permute.xlu0 %1404
  %1408 = vset.pattern.permute.xlu0 0
  %1409 = vperm.xlu0 %1408, %v1399
  %v1410 = vpop.permute.xlu0 %1409
  %1413 = vset.pattern.permute.xlu0 0
  %1414 = vperm.xlu0 %1413, %v1400
  %v1415 = vpop.permute.xlu0 %1414
  %1418 = vset.pattern.permute.xlu0 0
  %1419 = vperm.xlu0 %1418, %v1401
  %v1420 = vpop.permute.xlu0 %1419
  %v1426 = vunpack.c.l.b16 %v1385
  %v1427 = vunpack.c.l.b16 %v1386
  %v1428 = vunpack.c.l.b16 %v1387
  %v1429 = vunpack.c.l.b16 %v1388
  %v1430 = vpack.c.b16 %v1427, %v1426
  %v1431 = vpack.c.b16 %v1429, %v1428
  %v1433 = vsel %vm568, %v1430, 0
  %v1436 = vsel %vm568, %v1431, 0
  %1438 = vmatprep.subr.bf16.mxu0 %v1390
  %1439 = vmatpush1.bf16.msra.mxu0 %v1389
  %1440 = vmatprep.subr.bf16.mxu0 %v1394
  %1441 = vmatpush1.bf16.msra.mxu0 %v1393
  %1442 = vmatprep.subr.bf16.mxu0 0
  %1443 = vmatpush1.bf16.msra.mxu0 0
  %1444 = vmatprep.subr.bf16.mxu0 0
  %1445 = vmatpush1.bf16.msra.mxu0 0
  %1446 = vmatprep.subr.bf16.mxu0 0
  %1447 = vmatpush1.bf16.msra.mxu0 0
  %1448 = vmatprep.subr.bf16.mxu0 0
  %1449 = vmatpush1.bf16.msra.mxu0 0
  %1450 = vmatprep.subr.bf16.mxu0 0
  %1451 = vmatpush1.bf16.msra.mxu0 0
  %1452 = vmatprep.subr.bf16.mxu0 0
  %1453 = vmatpush1.bf16.msra.mxu0 0
  %1454 = vmatprep.subr.bf16.mxu0 0
  %1455 = vmatpush1.bf16.msra.mxu0 0
  %1456 = vmatprep.subr.bf16.mxu0 0
  %1457 = vmatpush1.bf16.msra.mxu0 0
  %1458 = vmatprep.subr.bf16.mxu0 0
  %1459 = vmatpush1.bf16.msra.mxu0 0
  %1460 = vmatprep.subr.bf16.mxu0 0
  %1461 = vmatpush1.bf16.msra.mxu0 0
  %1462 = vmatprep.subr.bf16.mxu0 0
  %1463 = vmatpush1.bf16.msra.mxu0 0
  %1464 = vmatprep.subr.bf16.mxu0 0
  %1465 = vmatpush1.bf16.msra.mxu0 0
  %1466 = vmatprep.subr.bf16.mxu0 0
  %1467 = vmatpush1.bf16.msra.mxu0 0
  %1468 = vmatprep.subr.bf16.mxu0 0
  %1469 = vmatpush1.bf16.msra.mxu0 0
  %1470 = vmatprep.mubr.bf16.mxu0 0
  %1471 = vmatmul.mubr.bf16.gmra.mrb[0].mxu0 %v1433
  %v1472 = vpop.f32.mrb[0].mxu0
  %v1473 = vadd.f32 %v1405, %v1472
  %v1474 = vpop.f32.mrb[0].mxu0
  %v1475 = vadd.f32 %v1405, %v1474
  %v1476 = vpop.f32.mrb[0].mxu0
  %v1477 = vadd.f32 %v1410, %v1476
  %v1478 = vpop.f32.mrb[0].mxu0
  %v1479 = vadd.f32 %v1410, %v1478
  %1480 = vmatprep.mubr.bf16.mxu0 0
  %1481 = vmatmul.mubr.bf16.gmra.mrb[0].mxu0 %v1436
  %v1482 = vpop.f32.mrb[0].mxu0
  %v1483 = vadd.f32 %v1415, %v1482
  %v1484 = vpop.f32.mrb[0].mxu0
  %v1485 = vadd.f32 %v1415, %v1484
  %v1486 = vpop.f32.mrb[0].mxu0
  %v1487 = vadd.f32 %v1420, %v1486
  %v1488 = vpop.f32.mrb[0].mxu0
  %v1489 = vadd.f32 %v1420, %v1488
  %1490 = vdwg.mxu0
  %1491 = vmatprep.subr.bf16.mxu0 %v1392
  %1492 = vmatpush1.bf16.msra.mxu0 %v1391
  %1493 = vmatprep.subr.bf16.mxu0 %v1396
  %1494 = vmatpush1.bf16.msra.mxu0 %v1395
  %1495 = vmatprep.subr.bf16.mxu0 0
  %1496 = vmatpush1.bf16.msra.mxu0 0
  %1497 = vmatprep.subr.bf16.mxu0 0
  %1498 = vmatpush1.bf16.msra.mxu0 0
  %1499 = vmatprep.subr.bf16.mxu0 0
  %1500 = vmatpush1.bf16.msra.mxu0 0
  %1501 = vmatprep.subr.bf16.mxu0 0
  %1502 = vmatpush1.bf16.msra.mxu0 0
  %1503 = vmatprep.subr.bf16.mxu0 0
  %1504 = vmatpush1.bf16.msra.mxu0 0
  %1505 = vmatprep.subr.bf16.mxu0 0
  %1506 = vmatpush1.bf16.msra.mxu0 0
  %1507 = vmatprep.subr.bf16.mxu0 0
  %1508 = vmatpush1.bf16.msra.mxu0 0
  %1509 = vmatprep.subr.bf16.mxu0 0
  %1510 = vmatpush1.bf16.msra.mxu0 0
  %1511 = vmatprep.subr.bf16.mxu0 0
  %1512 = vmatpush1.bf16.msra.mxu0 0
  %1513 = vmatprep.subr.bf16.mxu0 0
  %1514 = vmatpush1.bf16.msra.mxu0 0
  %1515 = vmatprep.subr.bf16.mxu0 0
  %1516 = vmatpush1.bf16.msra.mxu0 0
  %1517 = vmatprep.subr.bf16.mxu0 0
  %1518 = vmatpush1.bf16.msra.mxu0 0
  %1519 = vmatprep.subr.bf16.mxu0 0
  %1520 = vmatpush1.bf16.msra.mxu0 0
  %1521 = vmatprep.subr.bf16.mxu0 0
  %1522 = vmatpush1.bf16.msra.mxu0 0
  %1523 = vmatprep.mubr.bf16.mxu0 0
  %1524 = vmatmul.mubr.bf16.gmra.mrb[0].mxu0 %v1433
  %v1525 = vpop.f32.mrb[0].mxu0
  %v1526 = vadd.f32 %v1405, %v1525
  %v1527 = vpop.f32.mrb[0].mxu0
  %v1528 = vadd.f32 %v1405, %v1527
  %v1529 = vpop.f32.mrb[0].mxu0
  %v1530 = vadd.f32 %v1410, %v1529
  %v1531 = vpop.f32.mrb[0].mxu0
  %v1532 = vadd.f32 %v1410, %v1531
  %1533 = vmatprep.mubr.bf16.mxu0 0
  %1534 = vmatmul.mubr.bf16.gmra.mrb[0].mxu0 %v1436
  %v1535 = vpop.f32.mrb[0].mxu0
  %v1536 = vadd.f32 %v1415, %v1535
  %v1537 = vpop.f32.mrb[0].mxu0
  %v1538 = vadd.f32 %v1415, %v1537
  %v1539 = vpop.f32.mrb[0].mxu0
  %v1540 = vadd.f32 %v1420, %v1539
  %v1541 = vpop.f32.mrb[0].mxu0
  %v1542 = vadd.f32 %v1420, %v1541
  %1543 = vdwg.mxu0
  %v1544 = vadd.f32 %v1035, %v1473
  %v1545 = vadd.f32 %v1036, %v1475
  %v1546 = vadd.f32 %v1037, %v1526
  %v1547 = vadd.f32 %v1038, %v1528
  %v1548 = vadd.f32 %v1039, %v1477
  %v1549 = vadd.f32 %v1040, %v1479
  %v1550 = vadd.f32 %v1041, %v1530
  %v1551 = vadd.f32 %v1042, %v1532
  %v1552 = vadd.f32 %v1043, %v1483
  %v1553 = vadd.f32 %v1044, %v1485
  %v1554 = vadd.f32 %v1045, %v1536
  %v1555 = vadd.f32 %v1046, %v1538
  %v1556 = vadd.f32 %v1047, %v1487
  %v1557 = vadd.f32 %v1048, %v1489
  %v1558 = vadd.f32 %v1049, %v1540
  %v1559 = vadd.f32 %v1050, %v1542
  %v1560 = vld [vmem:[%s12] sm:$0xf]
  %v1561 = vld [vmem:[%s12 + $0x4] sm:$0x1]
  %v1562 = vpack.c.bf16 %v1548, %v1544
  %v1563 = vpack.c.bf16 %v1549, %v1545
  %v1564 = vpack.c.bf16 %v1550, %v1546
  %v1565 = vpack.c.bf16 %v1551, %v1547
  %v1566 = vpack.c.bf16 %v1556, %v1552
  %v1567 = vpack.c.bf16 %v1557, %v1553
  %v1568 = vpack.c.bf16 %v1558, %v1554
  %v1569 = vpack.c.bf16 %v1559, %v1555
  %v1570 = vld [vmem:[%s13] sm:$0xff]
  %v1571 = vld [vmem:[%s13 + $0x8] sm:$0x1]
  %1573 = vset.pattern.permute.xlu0 0
  %1574 = vperm.xlu0 %1573, %v1570
  %v1575 = vpop.permute.xlu0 %1574
  %1578 = vset.pattern.permute.xlu0 0
  %1579 = vperm.xlu0 %1578, %v1571
  %v1580 = vpop.permute.xlu0 %1579
  %v1584 = vunpack.c.l.b16 %v1560
  %v1585 = vunpack.c.l.b16 %v1561
  %v1586 = vpack.c.b16 %v1585, %v1584
  %v1588 = vsel %vm568, %v1586, 0
  %1590 = vmatprep.subr.bf16.mxu0 %v1563
  %1591 = vmatpush1.bf16.msra.mxu0 %v1562
  %1592 = vmatprep.subr.bf16.mxu0 %v1567
  %1593 = vmatpush1.bf16.msra.mxu0 %v1566
  %1594 = vmatprep.subr.bf16.mxu0 0
  %1595 = vmatpush1.bf16.msra.mxu0 0
  %1596 = vmatprep.subr.bf16.mxu0 0
  %1597 = vmatpush1.bf16.msra.mxu0 0
  %1598 = vmatprep.subr.bf16.mxu0 0
  %1599 = vmatpush1.bf16.msra.mxu0 0
  %1600 = vmatprep.subr.bf16.mxu0 0
  %1601 = vmatpush1.bf16.msra.mxu0 0
  %1602 = vmatprep.subr.bf16.mxu0 0
  %1603 = vmatpush1.bf16.msra.mxu0 0
  %1604 = vmatprep.subr.bf16.mxu0 0
  %1605 = vmatpush1.bf16.msra.mxu0 0
  %1606 = vmatprep.subr.bf16.mxu0 0
  %1607 = vmatpush1.bf16.msra.mxu0 0
  %1608 = vmatprep.subr.bf16.mxu0 0
  %1609 = vmatpush1.bf16.msra.mxu0 0
  %1610 = vmatprep.subr.bf16.mxu0 0
  %1611 = vmatpush1.bf16.msra.mxu0 0
  %1612 = vmatprep.subr.bf16.mxu0 0
  %1613 = vmatpush1.bf16.msra.mxu0 0
  %1614 = vmatprep.subr.bf16.mxu0 0
  %1615 = vmatpush1.bf16.msra.mxu0 0
  %1616 = vmatprep.subr.bf16.mxu0 0
  %1617 = vmatpush1.bf16.msra.mxu0 0
  %1618 = vmatprep.subr.bf16.mxu0 0
  %1619 = vmatpush1.bf16.msra.mxu0 0
  %1620 = vmatprep.subr.bf16.mxu0 0
  %1621 = vmatpush1.bf16.msra.mxu0 0
  %1622 = vmatprep.mubr.bf16.mxu0 0
  %1623 = vmatmul.mubr.bf16.gmra.mrb[0].mxu0 %v1588
  %v1624 = vpop.f32.mrb[0].mxu0
  %v1625 = vadd.f32 %v1575, %v1624
  %v1626 = vpop.f32.mrb[0].mxu0
  %v1627 = vadd.f32 %v1575, %v1626
  %v1628 = vpop.f32.mrb[0].mxu0
  %v1629 = vadd.f32 %v1580, %v1628
  %v1630 = vpop.f32.mrb[0].mxu0
  %v1631 = vadd.f32 %v1580, %v1630
  %1632 = vdwg.mxu0
  %1633 = vmatprep.subr.bf16.mxu0 %v1565
  %1634 = vmatpush1.bf16.msra.mxu0 %v1564
  %1635 = vmatprep.subr.bf16.mxu0 %v1569
  %1636 = vmatpush1.bf16.msra.mxu0 %v1568
  %1637 = vmatprep.subr.bf16.mxu0 0
  %1638 = vmatpush1.bf16.msra.mxu0 0
  %1639 = vmatprep.subr.bf16.mxu0 0
  %1640 = vmatpush1.bf16.msra.mxu0 0
  %1641 = vmatprep.subr.bf16.mxu0 0
  %1642 = vmatpush1.bf16.msra.mxu0 0
  %1643 = vmatprep.subr.bf16.mxu0 0
  %1644 = vmatpush1.bf16.msra.mxu0 0
  %1645 = vmatprep.subr.bf16.mxu0 0
  %1646 = vmatpush1.bf16.msra.mxu0 0
  %1647 = vmatprep.subr.bf16.mxu0 0
  %1648 = vmatpush1.bf16.msra.mxu0 0
  %1649 = vmatprep.subr.bf16.mxu0 0
  %1650 = vmatpush1.bf16.msra.mxu0 0
  %1651 = vmatprep.subr.bf16.mxu0 0
  %1652 = vmatpush1.bf16.msra.mxu0 0
  %1653 = vmatprep.subr.bf16.mxu0 0
  %1654 = vmatpush1.bf16.msra.mxu0 0
  %1655 = vmatprep.subr.bf16.mxu0 0
  %1656 = vmatpush1.bf16.msra.mxu0 0
  %1657 = vmatprep.subr.bf16.mxu0 0
  %1658 = vmatpush1.bf16.msra.mxu0 0
  %1659 = vmatprep.subr.bf16.mxu0 0
  %1660 = vmatpush1.bf16.msra.mxu0 0
  %1661 = vmatprep.subr.bf16.mxu0 0
  %1662 = vmatpush1.bf16.msra.mxu0 0
  %1663 = vmatprep.subr.bf16.mxu0 0
  %1664 = vmatpush1.bf16.msra.mxu0 0
  %1665 = vmatprep.mubr.bf16.mxu0 0
  %1666 = vmatmul.mubr.bf16.gmra.mrb[0].mxu0 %v1588
  %v1667 = vpop.f32.mrb[0].mxu0
  %v1668 = vadd.f32 %v1575, %v1667
  %v1669 = vpop.f32.mrb[0].mxu0
  %v1670 = vadd.f32 %v1575, %v1669
  %v1671 = vpop.f32.mrb[0].mxu0
  %v1672 = vadd.f32 %v1580, %v1671
  %v1673 = vpop.f32.mrb[0].mxu0
  %v1674 = vadd.f32 %v1580, %v1673
  %1675 = vdwg.mxu0
  %v1676 = vsel %vm229, %v1629, -inf
  %v1677 = vmax.f32 %v1625, %v1676
  %v1678 = vrot.slane %v1677, 4
  %v1679 = vmax.f32 %v1677, %v1678
  %v1680 = vrot.slane %v1679, 2
  %v1681 = vmax.f32 %v1679, %v1680
  %v1682 = vrot.slane %v1681, 1
  %v1683 = vmax.f32 %v1681, %v1682
  %v1684 = vsel %vm229, %v1631, -inf
  %v1685 = vmax.f32 %v1627, %v1684
  %v1686 = vrot.slane %v1685, 4
  %v1687 = vmax.f32 %v1685, %v1686
  %v1688 = vrot.slane %v1687, 2
  %v1689 = vmax.f32 %v1687, %v1688
  %v1690 = vrot.slane %v1689, 1
  %v1691 = vmax.f32 %v1689, %v1690
  %v1692 = vsel %vm229, %v1672, -inf
  %v1693 = vmax.f32 %v1668, %v1692
  %v1694 = vrot.slane %v1693, 4
  %v1695 = vmax.f32 %v1693, %v1694
  %v1696 = vrot.slane %v1695, 2
  %v1697 = vmax.f32 %v1695, %v1696
  %v1698 = vrot.slane %v1697, 1
  %v1699 = vmax.f32 %v1697, %v1698
  %v1700 = vsel %vm229, %v1674, -inf
  %v1701 = vmax.f32 %v1670, %v1700
  %v1702 = vrot.slane %v1701, 4
  %v1703 = vmax.f32 %v1701, %v1702
  %v1704 = vrot.slane %v1703, 2
  %v1705 = vmax.f32 %v1703, %v1704
  %v1706 = vrot.slane %v1705, 1
  %v1707 = vmax.f32 %v1705, %v1706
  %v1708 = vsub.f32 %v1625, %v1683
  %v1709 = vsub.f32 %v1627, %v1691
  %v1710 = vsub.f32 %v1668, %v1699
  %v1711 = vsub.f32 %v1670, %v1707
  %v1712 = vsub.f32 %v1629, %v1683
  %v1713 = vsub.f32 %v1631, %v1691
  %v1714 = vsub.f32 %v1672, %v1699
  %v1715 = vsub.f32 %v1674, %v1707
  %v1716 = vmul.f32 %v1708, 1.442695
  %v1717 = vpow.pop %v1716
  %v1718 = vmul.f32 %v1709, 1.442695
  %v1719 = vpow.pop %v1718
  %v1720 = vmul.f32 %v1710, 1.442695
  %v1721 = vpow.pop %v1720
  %v1722 = vmul.f32 %v1711, 1.442695
  %v1723 = vpow.pop %v1722
  %v1724 = vmul.f32 %v1712, 1.442695
  %v1725 = vpow.pop %v1724
  %v1726 = vmul.f32 %v1713, 1.442695
  %v1727 = vpow.pop %v1726
  %v1728 = vmul.f32 %v1714, 1.442695
  %v1729 = vpow.pop %v1728
  %v1730 = vmul.f32 %v1715, 1.442695
  %v1731 = vpow.pop %v1730
  %v1732 = vsel %vm229, %v1725, 0.0
  %v1733 = vadd.f32 %v1717, %v1732
  %v1734 = vrot.slane %v1733, 4
  %v1735 = vadd.f32 %v1733, %v1734
  %v1736 = vrot.slane %v1735, 2
  %v1737 = vadd.f32 %v1735, %v1736
  %v1738 = vrot.slane %v1737, 1
  %v1739 = vadd.f32 %v1737, %v1738
  %v1740 = vsel %vm229, %v1727, 0.0
  %v1741 = vadd.f32 %v1719, %v1740
  %v1742 = vrot.slane %v1741, 4
  %v1743 = vadd.f32 %v1741, %v1742
  %v1744 = vrot.slane %v1743, 2
  %v1745 = vadd.f32 %v1743, %v1744
  %v1746 = vrot.slane %v1745, 1
  %v1747 = vadd.f32 %v1745, %v1746
  %v1748 = vsel %vm229, %v1729, 0.0
  %v1749 = vadd.f32 %v1721, %v1748
  %v1750 = vrot.slane %v1749, 4
  %v1751 = vadd.f32 %v1749, %v1750
  %v1752 = vrot.slane %v1751, 2
  %v1753 = vadd.f32 %v1751, %v1752
  %v1754 = vrot.slane %v1753, 1
  %v1755 = vadd.f32 %v1753, %v1754
  %v1756 = vsel %vm229, %v1731, 0.0
  %v1757 = vadd.f32 %v1723, %v1756
  %v1758 = vrot.slane %v1757, 4
  %v1759 = vadd.f32 %v1757, %v1758
  %v1760 = vrot.slane %v1759, 2
  %v1761 = vadd.f32 %v1759, %v1760
  %v1762 = vrot.slane %v1761, 1
  %v1763 = vadd.f32 %v1761, %v1762
  %v1764 = vrcp.pop %v1739
  %v1765 = vrcp.pop %v1747
  %v1766 = vrcp.pop %v1755
  %v1767 = vrcp.pop %v1763
  %v1768 = vmul.f32 %v1717, %v1764
  %v1769 = vmul.f32 %v1719, %v1765
  %v1770 = vmul.f32 %v1721, %v1766
  %v1771 = vmul.f32 %v1723, %v1767
  %v1772 = vmul.f32 %v1725, %v1764
  %v1773 = vmul.f32 %v1727, %v1765
  %v1774 = vmul.f32 %v1729, %v1766
  %v1775 = vmul.f32 %v1731, %v1767
  %v1776 = vld [vmem:[%s2] sm:$0xff]
  %v1777 = vld [vmem:[%s2 + $0x8] sm:$0xff]
  %v1778 = vld [vmem:[%s2 + $0x10] sm:$0xff]
  %v1779 = vld [vmem:[%s2 + $0x18] sm:$0xff]
  %v1780 = vld [vmem:[%s2 + $0x20] sm:$0x1]
  %v1781 = vld [vmem:[%s2 + $0x28] sm:$0x1]
  %v1782 = vld [vmem:[%s2 + $0x30] sm:$0x1]
  %v1783 = vld [vmem:[%s2 + $0x38] sm:$0x1]
  %v1784 = vmul.f32 %v1776, %v1768
  %v1785 = vmul.f32 %v1777, %v1769
  %v1786 = vmul.f32 %v1778, %v1770
  %v1787 = vmul.f32 %v1779, %v1771
  %v1788 = vmul.f32 %v1780, %v1772
  %v1789 = vmul.f32 %v1781, %v1773
  %v1790 = vmul.f32 %v1782, %v1774
  %v1791 = vmul.f32 %v1783, %v1775
  %v1792 = vsel %vm229, %v1788, 0.0
  %v1793 = vadd.f32 %v1784, %v1792
  %v1794 = vrot.slane %v1793, 4
  %v1795 = vadd.f32 %v1793, %v1794
  %v1796 = vrot.slane %v1795, 2
  %v1797 = vadd.f32 %v1795, %v1796
  %v1798 = vrot.slane %v1797, 1
  %v1799 = vadd.f32 %v1797, %v1798
  %v1800 = vsel %vm229, %v1789, 0.0
  %v1801 = vadd.f32 %v1785, %v1800
  %v1802 = vrot.slane %v1801, 4
  %v1803 = vadd.f32 %v1801, %v1802
  %v1804 = vrot.slane %v1803, 2
  %v1805 = vadd.f32 %v1803, %v1804
  %v1806 = vrot.slane %v1805, 1
  %v1807 = vadd.f32 %v1805, %v1806
  %v1808 = vsel %vm229, %v1790, 0.0
  %v1809 = vadd.f32 %v1786, %v1808
  %v1810 = vrot.slane %v1809, 4
  %v1811 = vadd.f32 %v1809, %v1810
  %v1812 = vrot.slane %v1811, 2
  %v1813 = vadd.f32 %v1811, %v1812
  %v1814 = vrot.slane %v1813, 1
  %v1815 = vadd.f32 %v1813, %v1814
  %v1816 = vsel %vm229, %v1791, 0.0
  %v1817 = vadd.f32 %v1787, %v1816
  %v1818 = vrot.slane %v1817, 4
  %v1819 = vadd.f32 %v1817, %v1818
  %v1820 = vrot.slane %v1819, 2
  %v1821 = vadd.f32 %v1819, %v1820
  %v1822 = vrot.slane %v1821, 1
  %v1823 = vadd.f32 %v1821, %v1822
  %s1824 = scalar_lea.vmem %s2, 64
  %v1825 = vld [vmem:[%s1824] sm:$0xff]
  %v1826 = vld [vmem:[%s1824 + $0x8] sm:$0xff]
  %v1827 = vld [vmem:[%s1824 + $0x10] sm:$0xff]
  %v1828 = vld [vmem:[%s1824 + $0x18] sm:$0xff]
  %v1829 = vld [vmem:[%s1824 + $0x20] sm:$0x1]
  %v1830 = vld [vmem:[%s1824 + $0x28] sm:$0x1]
  %v1831 = vld [vmem:[%s1824 + $0x30] sm:$0x1]
  %v1832 = vld [vmem:[%s1824 + $0x38] sm:$0x1]
  %v1833 = vmul.f32 %v1825, %v1768
  %v1834 = vmul.f32 %v1826, %v1769
  %v1835 = vmul.f32 %v1827, %v1770
  %v1836 = vmul.f32 %v1828, %v1771
  %v1837 = vmul.f32 %v1829, %v1772
  %v1838 = vmul.f32 %v1830, %v1773
  %v1839 = vmul.f32 %v1831, %v1774
  %v1840 = vmul.f32 %v1832, %v1775
  %v1841 = vsel %vm229, %v1837, 0.0
  %v1842 = vadd.f32 %v1833, %v1841
  %v1843 = vrot.slane %v1842, 4
  %v1844 = vadd.f32 %v1842, %v1843
  %v1845 = vrot.slane %v1844, 2
  %v1846 = vadd.f32 %v1844, %v1845
  %v1847 = vrot.slane %v1846, 1
  %v1848 = vadd.f32 %v1846, %v1847
  %v1849 = vsel %vm229, %v1838, 0.0
  %v1850 = vadd.f32 %v1834, %v1849
  %v1851 = vrot.slane %v1850, 4
  %v1852 = vadd.f32 %v1850, %v1851
  %v1853 = vrot.slane %v1852, 2
  %v1854 = vadd.f32 %v1852, %v1853
  %v1855 = vrot.slane %v1854, 1
  %v1856 = vadd.f32 %v1854, %v1855
  %v1857 = vsel %vm229, %v1839, 0.0
  %v1858 = vadd.f32 %v1835, %v1857
  %v1859 = vrot.slane %v1858, 4
  %v1860 = vadd.f32 %v1858, %v1859
  %v1861 = vrot.slane %v1860, 2
  %v1862 = vadd.f32 %v1860, %v1861
  %v1863 = vrot.slane %v1862, 1
  %v1864 = vadd.f32 %v1862, %v1863
  %v1865 = vsel %vm229, %v1840, 0.0
  %v1866 = vadd.f32 %v1836, %v1865
  %v1867 = vrot.slane %v1866, 4
  %v1868 = vadd.f32 %v1866, %v1867
  %v1869 = vrot.slane %v1868, 2
  %v1870 = vadd.f32 %v1868, %v1869
  %v1871 = vrot.slane %v1870, 1
  %v1872 = vadd.f32 %v1870, %v1871
  %s1873 = scalar_lea.vmem %s2, 128
  %v1874 = vld [vmem:[%s1873] sm:$0xff]
  %v1875 = vld [vmem:[%s1873 + $0x8] sm:$0xff]
  %v1876 = vld [vmem:[%s1873 + $0x10] sm:$0xff]
  %v1877 = vld [vmem:[%s1873 + $0x18] sm:$0xff]
  %v1878 = vld [vmem:[%s1873 + $0x20] sm:$0x1]
  %v1879 = vld [vmem:[%s1873 + $0x28] sm:$0x1]
  %v1880 = vld [vmem:[%s1873 + $0x30] sm:$0x1]
  %v1881 = vld [vmem:[%s1873 + $0x38] sm:$0x1]
  %v1882 = vmul.f32 %v1874, %v1768
  %v1883 = vmul.f32 %v1875, %v1769
  %v1884 = vmul.f32 %v1876, %v1770
  %v1885 = vmul.f32 %v1877, %v1771
  %v1886 = vmul.f32 %v1878, %v1772
  %v1887 = vmul.f32 %v1879, %v1773
  %v1888 = vmul.f32 %v1880, %v1774
  %v1889 = vmul.f32 %v1881, %v1775
  %v1890 = vsel %vm229, %v1886, 0.0
  %v1891 = vadd.f32 %v1882, %v1890
  %v1892 = vrot.slane %v1891, 4
  %v1893 = vadd.f32 %v1891, %v1892
  %v1894 = vrot.slane %v1893, 2
  %v1895 = vadd.f32 %v1893, %v1894
  %v1896 = vrot.slane %v1895, 1
  %v1897 = vadd.f32 %v1895, %v1896
  %v1898 = vsel %vm229, %v1887, 0.0
  %v1899 = vadd.f32 %v1883, %v1898
  %v1900 = vrot.slane %v1899, 4
  %v1901 = vadd.f32 %v1899, %v1900
  %v1902 = vrot.slane %v1901, 2
  %v1903 = vadd.f32 %v1901, %v1902
  %v1904 = vrot.slane %v1903, 1
  %v1905 = vadd.f32 %v1903, %v1904
  %v1906 = vsel %vm229, %v1888, 0.0
  %v1907 = vadd.f32 %v1884, %v1906
  %v1908 = vrot.slane %v1907, 4
  %v1909 = vadd.f32 %v1907, %v1908
  %v1910 = vrot.slane %v1909, 2
  %v1911 = vadd.f32 %v1909, %v1910
  %v1912 = vrot.slane %v1911, 1
  %v1913 = vadd.f32 %v1911, %v1912
  %v1914 = vsel %vm229, %v1889, 0.0
  %v1915 = vadd.f32 %v1885, %v1914
  %v1916 = vrot.slane %v1915, 4
  %v1917 = vadd.f32 %v1915, %v1916
  %v1918 = vrot.slane %v1917, 2
  %v1919 = vadd.f32 %v1917, %v1918
  %v1920 = vrot.slane %v1919, 1
  %v1921 = vadd.f32 %v1919, %v1920
  %v1922 = vsel %vm229, %v1799, %v1848
  %v1923 = vsel %vm229, %v1807, %v1856
  %v1924 = vsel %vm229, %v1815, %v1864
  %v1925 = vsel %vm229, %v1823, %v1872
  %v1926 = vsel %vm99, %v1922, %v1897
  %v1927 = vsel %vm99, %v1923, %v1905
  %v1928 = vsel %vm99, %v1924, %v1913
  %v1929 = vsel %vm99, %v1925, %v1921
  %1930 = vst [vmem:[%s14] sm:$0xff] %v1768
  %1931 = vst [vmem:[%s14 + $0x8] sm:$0xff] %v1769
  %1932 = vst [vmem:[%s14 + $0x10] sm:$0x1] %v1772
  %1933 = vst [vmem:[%s14 + $0x18] sm:$0x1] %v1773
  %v1936 = vcombine.low %v1926, %v1927
  %1938 = vst [vmem:[%s15] sm:$0x77] %v1936
  %s1939 = scalar_lea.vmem %s14, 32
  %1940 = vst [vmem:[%s1939] sm:$0xff] %v1770
  %1941 = vst [vmem:[%s1939 + $0x8] sm:$0xff] %v1771
  %1942 = vst [vmem:[%s1939 + $0x10] sm:$0x1] %v1774
  %1943 = vst [vmem:[%s1939 + $0x18] sm:$0x1] %v1775
  %v1946 = vcombine.low %v1928, %v1929
  %s1948 = scalar_lea.vmem %s15, 8
  %1949 = vst [vmem:[%s1948] sm:$0x77] %v1946
  // Predicated region
  $region58: #{kernel_model_forward.1} parent=0 // pred_check
    _
  $region59: #{kernel_model_forward.1} parent=0 // pred_check_branch
    %1951 = sbr.rel (0) target = $region61
  $region60: #{kernel_model_forward.1} parent=0 // pred_region
    _
  $region61: #{kernel_model_forward.1} parent=0 // pred_fallthru
    _
  // Predicated region
  $region62: #{kernel_model_forward.1} parent=0 // pred_check
    _
  $region63: #{kernel_model_forward.1} parent=0 // pred_check_branch
    %1953 = sbr.rel (0) target = $region65
  $region64: #{kernel_model_forward.1} parent=0 // pred_region
    _
  $region65: #{kernel_model_forward.1} parent=0 // pred_fallthru
    _
  // Predicated region
  $region66: #{kernel_model_forward.1} parent=0 // pred_check
    _
  $region67: #{kernel_model_forward.1} parent=0 // pred_check_branch
    %1955 = sbr.rel (0) target = $region69
  $region68: #{kernel_model_forward.1} parent=0 // pred_region
    _
  $region69: #{kernel_model_forward.1} parent=0 // pred_fallthru
    _
  // Predicated region
  $region70: #{kernel_model_forward.1} parent=0 // pred_check
    _
  $region71: #{kernel_model_forward.1} parent=0 // pred_check_branch
    %1957 = sbr.rel (0) target = $region73
  $region72: #{kernel_model_forward.1} parent=0 // pred_region
    _
  $region73: #{kernel_model_forward.1} parent=0 // pred_fallthru
    _

</llo_original>
